<compile_context>
chip_gen: v7x
topology: tpu7x:2x2x1
jax: 0.10.0
libtpu: 0.0.40
codegen_flags: <defaults>
</compile_context>

<pallas_src>
import jax
import jax.numpy as jnp
from jax.experimental import pallas as pl
from jax.experimental.pallas import tpu as pltpu

EPS = 1e-5


def aux_head_forward(x, params, num_classes):
    """x: (N, C, 8, 8) float32, NCHW (PyTorch convention)."""
    N, C, H, W = x.shape
    assert H == 8 and W == 8, "module assumes 8x8 input"

    # ---------------- glue: layout + weight folding (plain JAX, outside kernel) ----------------
    # Raw channels-last rows: one row per sample, 64*C features ((h,w,c)-major).
    x_rows = jnp.transpose(x, (0, 2, 3, 1)).reshape(N, 64 * C)

    # Batch tiling / padding (padded rows are zero -> contribute 0 to BN1 sums).
    tn = min(128, ((N + 7) // 8) * 8)
    n_pad = tn * pl.cdiv(N, tn)
    if n_pad > N:
        x_rows = jnp.pad(x_rows, ((0, n_pad - N), (0, 0)))

    # Fold {window gather, avg-pool /25, conv1} into one (64*C, 512) weight.
    # AvgPool2d(5, stride=3, padding=0) on 8x8 -> output positions hs, ws in {0, 3}.
    w1 = params["conv1_w"].reshape(128, C)                                    # (O=128, C)
    mask = jnp.zeros((2, 2, 8, 8), jnp.float32)
    for oh, hs in enumerate((0, 3)):
        for ow, ws in enumerate((0, 3)):
            mask = mask.at[oh, ow, hs:hs + 5, ws:ws + 5].set(1.0 / 25.0)
    # W_big[(h*8+w)*C + c, (oh*2+ow)*128 + o] = mask[oh,ow,h,w] * w1[o,c]
    w_big = jnp.einsum('pqhw,oc->hwcpqo', mask, w1).reshape(64 * C, 4 * 128)  # (64C, 512)

    # Conv2d(128,768,2) -> (512, 768): row = (kh*2+kw)*128 + c, matching h1 lane blocks.
    w2_flat = jnp.transpose(params["conv2_w"], (2, 3, 1, 0)).reshape(512, 768)

    # BN1 affine params tiled across the 4 position blocks -> (1, 512).
    g1 = jnp.tile(params["bn1_g"].reshape(1, 128), (1, 4))
    b1 = jnp.tile(params["bn1_b"].reshape(1, 128), (1, 4))
    g2 = params["bn2_g"].reshape(1, 768)
    b2 = params["bn2_b"].reshape(1, 768)

    # Lane-dense classifier: pad output columns to a multiple of 128.
    ncp = max(128, ((num_classes + 127) // 128) * 128)
    wfc = jnp.pad(params["fc_w"].T, ((0, 0), (0, ncp - num_classes)))         # (768, ncp)
    bfc = jnp.pad(params["fc_b"].reshape(1, num_classes), ((0, 0), (0, ncp - num_classes)))

    n_real = N
    grid = (n_pad // tn,)

    def kernel(x_ref, wbig_ref, g1_ref, b1_ref, w2_ref, g2_ref, b2_ref,
               wfc_ref, bfc_ref, out_ref, h1_scr):
        i = pl.program_id(0)

        # ---- stage 1 (per batch tile): ReLU -> folded {window, avg-pool, conv1} ----
        r = jnp.maximum(x_ref[...], 0.0)                                      # (tn, 64C)
        h1 = jnp.dot(r, wbig_ref[...], preferred_element_type=jnp.float32)    # (tn, 512)
        h1_scr[pl.ds(pl.multiple_of(i * tn, tn), tn), :] = h1

        # ---- epilogue on the last grid step: BN1 -> ReLU -> conv2 -> BN2 -> ReLU -> FC ----
        @pl.when(i == pl.num_programs(0) - 1)
        def _():
            h1_all = h1_scr[...]                                              # (n_pad, 512)

            # BN1: training-mode batch stats per channel over N*2*2 positions, one pass.
            s = jnp.sum(h1_all, axis=0, keepdims=True)                        # (1, 512)
            ss = jnp.sum(h1_all * h1_all, axis=0, keepdims=True)              # (1, 512)
            s = s[:, 0:128] + s[:, 128:256] + s[:, 256:384] + s[:, 384:512]
            ss = ss[:, 0:128] + ss[:, 128:256] + ss[:, 256:384] + ss[:, 384:512]
            cnt = 4.0 * n_real                                                # padded rows are 0
            mu = s / cnt
            var = ss / cnt - mu * mu
            inv = jax.lax.rsqrt(var + EPS)
            mu_t = jnp.concatenate([mu, mu, mu, mu], axis=1)                  # (1, 512)
            inv_t = jnp.concatenate([inv, inv, inv, inv], axis=1)
            h1n = (h1_all - mu_t) * inv_t * g1_ref[...] + b1_ref[...]
            h1n = jnp.maximum(h1n, 0.0)                                       # ReLU

            # Conv2d(128,768,2) on the 2x2 map == single K=512 matmul.
            h2 = jnp.dot(h1n, w2_ref[...], preferred_element_type=jnp.float32)  # (n_pad, 768)

            # self.bn (BatchNorm2d(768)) only if batch > 1 -- static, like PyTorch forward.
            if n_real > 1:
                h2r = h2[:n_real, :]                                          # real rows only
                s2 = jnp.sum(h2r, axis=0, keepdims=True)
                ss2 = jnp.sum(h2r * h2r, axis=0, keepdims=True)
                mu2 = s2 / float(n_real)
                var2 = ss2 / float(n_real) - mu2 * mu2
                h2 = (h2 - mu2) * jax.lax.rsqrt(var2 + EPS) * g2_ref[...] + b2_ref[...]
            h2 = jnp.maximum(h2, 0.0)                                         # self.relu

            # self.classifier (lane-dense padded output).
            out_ref[...] = (jnp.dot(h2, wfc_ref[...], preferred_element_type=jnp.float32)
                            + bfc_ref[...])

    out = pl.pallas_call(
        kernel,
        out_shape=jax.ShapeDtypeStruct((n_pad, ncp), jnp.float32),
        grid=grid,
        in_specs=[
            pl.BlockSpec((tn, 64 * C), lambda i: (i, 0)),     # streamed batch tiles
            pl.BlockSpec((64 * C, 512), lambda i: (0, 0)),    # resident weights below
            pl.BlockSpec((1, 512), lambda i: (0, 0)),
            pl.BlockSpec((1, 512), lambda i: (0, 0)),
            pl.BlockSpec((512, 768), lambda i: (0, 0)),
            pl.BlockSpec((1, 768), lambda i: (0, 0)),
            pl.BlockSpec((1, 768), lambda i: (0, 0)),
            pl.BlockSpec((768, ncp), lambda i: (0, 0)),
            pl.BlockSpec((1, ncp), lambda i: (0, 0)),
        ],
        out_specs=pl.BlockSpec((n_pad, ncp), lambda i: (0, 0)),
        scratch_shapes=[pltpu.VMEM((n_pad, 512), jnp.float32)],
        compiler_params=pltpu.CompilerParams(
            dimension_semantics=("arbitrary",),
            vmem_limit_bytes=32 * 1024 * 1024),
    )(x_rows, w_big, g1, b1, w2_flat, g2, b2, wfc, bfc)

    return out[:N, :num_classes]


def ref_forward(x, params):
    """Pure-JAX reference mirroring the PyTorch forward in NCHW."""
    r = jnp.maximum(x, 0.0)
    pooled = jnp.stack(
        [jnp.stack([jnp.mean(r[:, :, hs:hs + 5, ws:ws + 5], axis=(2, 3))
                    for ws in (0, 3)], axis=-1) for hs in (0, 3)], axis=-2)   # (N, C, 2, 2)
    h1 = jnp.einsum('nchw,oc->nohw', pooled, params["conv1_w"].reshape(128, -1))
    mu = jnp.mean(h1, axis=(0, 2, 3), keepdims=True)
    var = jnp.mean((h1 - mu) ** 2, axis=(0, 2, 3), keepdims=True)
    h1 = ((h1 - mu) * jax.lax.rsqrt(var + EPS)
          * params["bn1_g"][None, :, None, None] + params["bn1_b"][None, :, None, None])
    h1 = jnp.maximum(h1, 0.0)
    h2 = jnp.einsum('nchw,ochw->no', h1, params["conv2_w"])                   # (N, 768)
    if x.shape[0] > 1:
        mu2 = jnp.mean(h2, axis=0, keepdims=True)
        var2 = jnp.mean((h2 - mu2) ** 2, axis=0, keepdims=True)
        h2 = (h2 - mu2) * jax.lax.rsqrt(var2 + EPS) * params["bn2_g"][None, :] + params["bn2_b"][None, :]
    h2 = jnp.maximum(h2, 0.0)
    return h2 @ params["fc_w"].T + params["fc_b"][None, :]


if __name__ == "__main__":
    N, C, num_classes = 2, 4, 10
    key = jax.random.PRNGKey(0)
    ks = jax.random.split(key, 8)
    x = jax.random.normal(ks[0], (N, C, 8, 8), jnp.float32)

    # Deterministic synthetic parameters (shapes from AuxiliaryHeadCIFAR.__init__).
    params = dict(
        conv1_w=0.10 * jax.random.normal(ks[1], (128, C, 1, 1), jnp.float32),
        bn1_g=1.0 + 0.1 * jax.random.normal(ks[2], (128,), jnp.float32),
        bn1_b=0.10 * jax.random.normal(ks[3], (128,), jnp.float32),
        conv2_w=0.05 * jax.random.normal(ks[4], (768, 128, 2, 2), jnp.float32),
        bn2_g=1.0 + 0.1 * jax.random.normal(ks[5], (768,), jnp.float32),
        bn2_b=0.10 * jax.random.normal(ks[6], (768,), jnp.float32),
        fc_w=0.05 * jax.random.normal(ks[7], (num_classes, 768), jnp.float32),
        fc_b=jnp.linspace(-0.5, 0.5, num_classes).astype(jnp.float32),
    )

    out = aux_head_forward(x, params, num_classes)
    out = jax.block_until_ready(out)
    ref = ref_forward(x, params)

    assert out.shape == (N, num_classes)
    assert jnp.allclose(out, ref, rtol=1e-4, atol=1e-4), (out, ref)
    print("KERNEL_OK")
</pallas_src>

<mosaic_0001>
module attributes {stable_mosaic.version = 11 : i64} {
  func.func @kernel(%arg0: i32, %arg1: memref<8x256xf32, #tpu.memory_space<vmem>>, %arg2: memref<256x512xf32, #tpu.memory_space<vmem>>, %arg3: memref<1x512xf32, #tpu.memory_space<vmem>>, %arg4: memref<1x512xf32, #tpu.memory_space<vmem>>, %arg5: memref<512x768xf32, #tpu.memory_space<vmem>>, %arg6: memref<1x768xf32, #tpu.memory_space<vmem>>, %arg7: memref<1x768xf32, #tpu.memory_space<vmem>>, %arg8: memref<768x128xf32, #tpu.memory_space<vmem>>, %arg9: memref<1x128xf32, #tpu.memory_space<vmem>>, %arg10: memref<8x128xf32, #tpu.memory_space<vmem>>, %arg11: memref<8x512xf32, #tpu.memory_space<vmem>>) attributes {dimension_semantics = [#tpu.dimension_semantics<arbitrary>], iteration_bounds = array<i64: 1>, scalar_prefetch = 0 : i64, scratch_operands = 1 : i64, tpu.core_type = #tpu.core_type<tc>, window_params = [{transform_indices = @transform_0, window_bounds = array<i64: 8, 256>}, {pipeline_mode = #tpu.pipeline_mode<synchronous>, transform_indices = @transform_1, window_bounds = array<i64: 256, 512>}, {pipeline_mode = #tpu.pipeline_mode<synchronous>, transform_indices = @transform_2, window_bounds = array<i64: 1, 512>}, {pipeline_mode = #tpu.pipeline_mode<synchronous>, transform_indices = @transform_3, window_bounds = array<i64: 1, 512>}, {pipeline_mode = #tpu.pipeline_mode<synchronous>, transform_indices = @transform_4, window_bounds = array<i64: 512, 768>}, {pipeline_mode = #tpu.pipeline_mode<synchronous>, transform_indices = @transform_5, window_bounds = array<i64: 1, 768>}, {pipeline_mode = #tpu.pipeline_mode<synchronous>, transform_indices = @transform_6, window_bounds = array<i64: 1, 768>}, {pipeline_mode = #tpu.pipeline_mode<synchronous>, transform_indices = @transform_7, window_bounds = array<i64: 768, 128>}, {pipeline_mode = #tpu.pipeline_mode<synchronous>, transform_indices = @transform_8, window_bounds = array<i64: 1, 128>}, {pipeline_mode = #tpu.pipeline_mode<synchronous>, transform_indices = @transform_9, window_bounds = array<i64: 8, 128>}]} {
    %c0 = arith.constant 0 : index
    %c0_0 = arith.constant 0 : index
    %0 = vector.load %arg1[%c0, %c0_0] : memref<8x256xf32, #tpu.memory_space<vmem>>, vector<8x256xf32>
    %cst = arith.constant 0.000000e+00 : f32
    %1 = vector.broadcast %cst : f32 to vector<8x256xf32>
    %2 = arith.maximumf %0, %1 : vector<8x256xf32>
    %c0_1 = arith.constant 0 : index
    %c0_2 = arith.constant 0 : index
    %3 = vector.load %arg2[%c0_1, %c0_2] : memref<256x512xf32, #tpu.memory_space<vmem>>, vector<256x512xf32>
    %cst_3 = arith.constant dense<0.000000e+00> : vector<8x512xf32>
    %4 = tpu.matmul %2, %3, %cst_3 {dimension_numbers = #tpu.dot_dimension_numbers<[1], [0], [0], [1], [0, 0, 1, 1], [], []>} : vector<8x256xf32>, vector<256x512xf32>, vector<8x512xf32> -> vector<8x512xf32>
    %c8_i32 = arith.constant 8 : i32
    %5 = arith.muli %arg0, %c8_i32 : i32
    %6 = tpu.assume_multiple %5, 8 : i32
    %7 = arith.index_cast %6 : i32 to index
    %c0_4 = arith.constant 0 : index
    %8 = vector.load %arg11[%7, %c0_4] : memref<8x512xf32, #tpu.memory_space<vmem>>, vector<8x512xf32>
    tpu.vector_store %arg11[%7, %c0_4], %4 {strides = array<i32>} : memref<8x512xf32, #tpu.memory_space<vmem>>, vector<8x512xf32>,
    %c0_i32 = arith.constant 0 : i32
    %9 = arith.cmpi eq, %arg0, %c0_i32 : i32
    %10 = arith.extui %9 : i1 to i32
    %c0_i32_5 = arith.constant 0 : i32
    %11 = arith.cmpi ne, %10, %c0_i32_5 : i32
    scf.if %11 {
      %c0_6 = arith.constant 0 : index
      %c0_7 = arith.constant 0 : index
      %12 = vector.load %arg11[%c0_6, %c0_7] : memref<8x512xf32, #tpu.memory_space<vmem>>, vector<8x512xf32>
      %cst_8 = arith.constant dense<0.000000e+00> : vector<512xf32>
      %13 = vector.multi_reduction <add>, %12, %cst_8 [0] : vector<8x512xf32> to vector<512xf32>
      %14 = vector.shape_cast %13 : vector<512xf32> to vector<1x512xf32>
      %15 = arith.mulf %12, %12 : vector<8x512xf32>
      %cst_9 = arith.constant dense<0.000000e+00> : vector<512xf32>
      %16 = vector.multi_reduction <add>, %15, %cst_9 [0] : vector<8x512xf32> to vector<512xf32>
      %17 = vector.shape_cast %16 : vector<512xf32> to vector<1x512xf32>
      %18 = vector.extract_strided_slice %14 {offsets = [0, 0], sizes = [1, 128], strides = [1, 1]} : vector<1x512xf32> to vector<1x128xf32>
      %19 = vector.extract_strided_slice %14 {offsets = [0, 128], sizes = [1, 128], strides = [1, 1]} : vector<1x512xf32> to vector<1x128xf32>
      %20 = arith.addf %18, %19 : vector<1x128xf32>
      %21 = vector.extract_strided_slice %14 {offsets = [0, 256], sizes = [1, 128], strides = [1, 1]} : vector<1x512xf32> to vector<1x128xf32>
      %22 = arith.addf %20, %21 : vector<1x128xf32>
      %23 = vector.extract_strided_slice %14 {offsets = [0, 384], sizes = [1, 128], strides = [1, 1]} : vector<1x512xf32> to vector<1x128xf32>
      %24 = arith.addf %22, %23 : vector<1x128xf32>
      %25 = vector.extract_strided_slice %17 {offsets = [0, 0], sizes = [1, 128], strides = [1, 1]} : vector<1x512xf32> to vector<1x128xf32>
      %26 = vector.extract_strided_slice %17 {offsets = [0, 128], sizes = [1, 128], strides = [1, 1]} : vector<1x512xf32> to vector<1x128xf32>
      %27 = arith.addf %25, %26 : vector<1x128xf32>
      %28 = vector.extract_strided_slice %17 {offsets = [0, 256], sizes = [1, 128], strides = [1, 1]} : vector<1x512xf32> to vector<1x128xf32>
      %29 = arith.addf %27, %28 : vector<1x128xf32>
      %30 = vector.extract_strided_slice %17 {offsets = [0, 384], sizes = [1, 128], strides = [1, 1]} : vector<1x512xf32> to vector<1x128xf32>
      %31 = arith.addf %29, %30 : vector<1x128xf32>
      %cst_10 = arith.constant 8.000000e+00 : f32
      %32 = vector.broadcast %cst_10 : f32 to vector<1x128xf32>
      %33 = arith.divf %24, %32 : vector<1x128xf32>
      %cst_11 = arith.constant 8.000000e+00 : f32
      %34 = vector.broadcast %cst_11 : f32 to vector<1x128xf32>
      %35 = arith.divf %31, %34 : vector<1x128xf32>
      %36 = arith.mulf %33, %33 : vector<1x128xf32>
      %37 = arith.subf %35, %36 : vector<1x128xf32>
      %cst_12 = arith.constant 9.99999974E-6 : f32
      %38 = vector.broadcast %cst_12 : f32 to vector<1x128xf32>
      %39 = arith.addf %37, %38 : vector<1x128xf32>
      %40 = math.rsqrt %39 : vector<1x128xf32>
      %41 = tpu.concatenate %33, %33, %33, %33 in 1 : vector<1x128xf32>, vector<1x128xf32>, vector<1x128xf32>, vector<1x128xf32> -> vector<1x512xf32>
      %42 = tpu.concatenate %40, %40, %40, %40 in 1 : vector<1x128xf32>, vector<1x128xf32>, vector<1x128xf32>, vector<1x128xf32> -> vector<1x512xf32>
      %43 = vector.broadcast %41 : vector<1x512xf32> to vector<8x512xf32>
      %44 = arith.subf %12, %43 : vector<8x512xf32>
      %45 = vector.broadcast %42 : vector<1x512xf32> to vector<8x512xf32>
      %46 = arith.mulf %44, %45 : vector<8x512xf32>
      %c0_13 = arith.constant 0 : index
      %c0_14 = arith.constant 0 : index
      %47 = vector.load %arg3[%c0_13, %c0_14] : memref<1x512xf32, #tpu.memory_space<vmem>>, vector<1x512xf32>
      %48 = vector.broadcast %47 : vector<1x512xf32> to vector<8x512xf32>
      %49 = arith.mulf %46, %48 : vector<8x512xf32>
      %c0_15 = arith.constant 0 : index
      %c0_16 = arith.constant 0 : index
      %50 = vector.load %arg4[%c0_15, %c0_16] : memref<1x512xf32, #tpu.memory_space<vmem>>, vector<1x512xf32>
      %51 = vector.broadcast %50 : vector<1x512xf32> to vector<8x512xf32>
      %52 = arith.addf %49, %51 : vector<8x512xf32>
      %cst_17 = arith.constant 0.000000e+00 : f32
      %53 = vector.broadcast %cst_17 : f32 to vector<8x512xf32>
      %54 = arith.maximumf %52, %53 : vector<8x512xf32>
      %c0_18 = arith.constant 0 : index
      %c0_19 = arith.constant 0 : index
      %55 = vector.load %arg5[%c0_18, %c0_19] : memref<512x768xf32, #tpu.memory_space<vmem>>, vector<512x768xf32>
      %cst_20 = arith.constant dense<0.000000e+00> : vector<8x768xf32>
      %56 = tpu.matmul %54, %55, %cst_20 {dimension_numbers = #tpu.dot_dimension_numbers<[1], [0], [0], [1], [0, 0, 1, 1], [], []>} : vector<8x512xf32>, vector<512x768xf32>, vector<8x768xf32> -> vector<8x768xf32>
      %57 = vector.extract_strided_slice %56 {offsets = [0, 0], sizes = [2, 768], strides = [1, 1]} : vector<8x768xf32> to vector<2x768xf32>
      %cst_21 = arith.constant dense<0.000000e+00> : vector<768xf32>
      %58 = vector.multi_reduction <add>, %57, %cst_21 [0] : vector<2x768xf32> to vector<768xf32>
      %59 = vector.shape_cast %58 : vector<768xf32> to vector<1x768xf32>
      %60 = arith.mulf %57, %57 : vector<2x768xf32>
      %cst_22 = arith.constant dense<0.000000e+00> : vector<768xf32>
      %61 = vector.multi_reduction <add>, %60, %cst_22 [0] : vector<2x768xf32> to vector<768xf32>
      %62 = vector.shape_cast %61 : vector<768xf32> to vector<1x768xf32>
      %cst_23 = arith.constant 2.000000e+00 : f32
      %63 = vector.broadcast %cst_23 : f32 to vector<1x768xf32>
      %64 = arith.divf %59, %63 : vector<1x768xf32>
      %cst_24 = arith.constant 2.000000e+00 : f32
      %65 = vector.broadcast %cst_24 : f32 to vector<1x768xf32>
      %66 = arith.divf %62, %65 : vector<1x768xf32>
      %67 = arith.mulf %64, %64 : vector<1x768xf32>
      %68 = arith.subf %66, %67 : vector<1x768xf32>
      %69 = vector.broadcast %64 : vector<1x768xf32> to vector<8x768xf32>
      %70 = arith.subf %56, %69 : vector<8x768xf32>
      %cst_25 = arith.constant 9.99999974E-6 : f32
      %71 = vector.broadcast %cst_25 : f32 to vector<1x768xf32>
      %72 = arith.addf %68, %71 : vector<1x768xf32>
      %73 = math.rsqrt %72 : vector<1x768xf32>
      %74 = vector.broadcast %73 : vector<1x768xf32> to vector<8x768xf32>
      %75 = arith.mulf %70, %74 : vector<8x768xf32>
      %c0_26 = arith.constant 0 : index
      %c0_27 = arith.constant 0 : index
      %76 = vector.load %arg6[%c0_26, %c0_27] : memref<1x768xf32, #tpu.memory_space<vmem>>, vector<1x768xf32>
      %77 = vector.broadcast %76 : vector<1x768xf32> to vector<8x768xf32>
      %78 = arith.mulf %75, %77 : vector<8x768xf32>
      %c0_28 = arith.constant 0 : index
      %c0_29 = arith.constant 0 : index
      %79 = vector.load %arg7[%c0_28, %c0_29] : memref<1x768xf32, #tpu.memory_space<vmem>>, vector<1x768xf32>
      %80 = vector.broadcast %79 : vector<1x768xf32> to vector<8x768xf32>
      %81 = arith.addf %78, %80 : vector<8x768xf32>
      %cst_30 = arith.constant 0.000000e+00 : f32
      %82 = vector.broadcast %cst_30 : f32 to vector<8x768xf32>
      %83 = arith.maximumf %81, %82 : vector<8x768xf32>
      %c0_31 = arith.constant 0 : index
      %c0_32 = arith.constant 0 : index
      %84 = vector.load %arg8[%c0_31, %c0_32] : memref<768x128xf32, #tpu.memory_space<vmem>>, vector<768x128xf32>
      %cst_33 = arith.constant dense<0.000000e+00> : vector<8x128xf32>
      %85 = tpu.matmul %83, %84, %cst_33 {dimension_numbers = #tpu.dot_dimension_numbers<[1], [0], [0], [1], [0, 0, 1, 1], [], []>} : vector<8x768xf32>, vector<768x128xf32>, vector<8x128xf32> -> vector<8x128xf32>
      %c0_34 = arith.constant 0 : index
      %c0_35 = arith.constant 0 : index
      %86 = vector.load %arg9[%c0_34, %c0_35] : memref<1x128xf32, #tpu.memory_space<vmem>>, vector<1x128xf32>
      %87 = vector.broadcast %86 : vector<1x128xf32> to vector<8x128xf32>
      %88 = arith.addf %85, %87 : vector<8x128xf32>
      %c0_36 = arith.constant 0 : index
      %c0_37 = arith.constant 0 : index
      %89 = vector.load %arg10[%c0_36, %c0_37] : memref<8x128xf32, #tpu.memory_space<vmem>>, vector<8x128xf32>
      tpu.vector_store %arg10[%c0_36, %c0_37], %88 {strides = array<i32>} : memref<8x128xf32, #tpu.memory_space<vmem>>, vector<8x128xf32>,
    } else {
    }
    return
  }
  func.func @transform_0(%arg0: i32) -> (i32, i32) {
    %c0_i32 = arith.constant 0 : i32
    %c0_i32_0 = arith.constant 0 : i32
    return %arg0, %c0_i32 : i32, i32
  }
  func.func @transform_1(%arg0: i32) -> (i32, i32) {
    %c0_i32 = arith.constant 0 : i32
    %c0_i32_0 = arith.constant 0 : i32
    %c0_i32_1 = arith.constant 0 : i32
    return %c0_i32, %c0_i32_0 : i32, i32
  }
  func.func @transform_2(%arg0: i32) -> (i32, i32) {
    %c0_i32 = arith.constant 0 : i32
    %c0_i32_0 = arith.constant 0 : i32
    %c0_i32_1 = arith.constant 0 : i32
    return %c0_i32, %c0_i32_0 : i32, i32
  }
  func.func @transform_3(%arg0: i32) -> (i32, i32) {
    %c0_i32 = arith.constant 0 : i32
    %c0_i32_0 = arith.constant 0 : i32
    %c0_i32_1 = arith.constant 0 : i32
    return %c0_i32, %c0_i32_0 : i32, i32
  }
  func.func @transform_4(%arg0: i32) -> (i32, i32) {
    %c0_i32 = arith.constant 0 : i32
    %c0_i32_0 = arith.constant 0 : i32
    %c0_i32_1 = arith.constant 0 : i32
    return %c0_i32, %c0_i32_0 : i32, i32
  }
  func.func @transform_5(%arg0: i32) -> (i32, i32) {
    %c0_i32 = arith.constant 0 : i32
    %c0_i32_0 = arith.constant 0 : i32
    %c0_i32_1 = arith.constant 0 : i32
    return %c0_i32, %c0_i32_0 : i32, i32
  }
  func.func @transform_6(%arg0: i32) -> (i32, i32) {
    %c0_i32 = arith.constant 0 : i32
    %c0_i32_0 = arith.constant 0 : i32
    %c0_i32_1 = arith.constant 0 : i32
    return %c0_i32, %c0_i32_0 : i32, i32
  }
  func.func @transform_7(%arg0: i32) -> (i32, i32) {
    %c0_i32 = arith.constant 0 : i32
    %c0_i32_0 = arith.constant 0 : i32
    %c0_i32_1 = arith.constant 0 : i32
    return %c0_i32, %c0_i32_0 : i32, i32
  }
  func.func @transform_8(%arg0: i32) -> (i32, i32) {
    %c0_i32 = arith.constant 0 : i32
    %c0_i32_0 = arith.constant 0 : i32
    %c0_i32_1 = arith.constant 0 : i32
    return %c0_i32, %c0_i32_0 : i32, i32
  }
  func.func @transform_9(%arg0: i32) -> (i32, i32) {
    %c0_i32 = arith.constant 0 : i32
    %c0_i32_0 = arith.constant 0 : i32
    %c0_i32_1 = arith.constant 0 : i32
    return %c0_i32, %c0_i32_0 : i32, i32
  }
}

</mosaic_0001>

<llo_original>
// kernel: tpu_custom_call.1
$region0: #{tpu_custom_call.1}
  #allocation0 [shape = 'u32[]', space=smem, size = 0x4, offset = 0x4, fixed_abs, tag = 'smem constant byte address 0x4 - core index']
  #allocation1 [shape = 'u32[144,128]{1,0:T(1,128)}', space=vmem, size = 0x12000, scoped, tag = 'internal scratch']
  #allocation2 [shape = 'f32[8,512]{1,0:T(8,128)}', space=vmem, size = 0x4000, scoped, tag = 'scratch operand']
  %s0 = inlined_call_operand.hbm [shape: f32[8,256], index: 0, kind: input, shape index: {}]
  %s1 = inlined_call_operand.hbm [shape: f32[256,512], index: 1, kind: input, shape index: {}]
  %s2 = inlined_call_operand.hbm [shape: f32[1,512], index: 2, kind: input, shape index: {}]
  %s3 = inlined_call_operand.hbm [shape: f32[1,512], index: 3, kind: input, shape index: {}]
  %s4 = inlined_call_operand.hbm [shape: f32[512,768], index: 4, kind: input, shape index: {}]
  %s5 = inlined_call_operand.hbm [shape: f32[1,768], index: 5, kind: input, shape index: {}]
  %s6 = inlined_call_operand.hbm [shape: f32[1,768], index: 6, kind: input, shape index: {}]
  %s7 = inlined_call_operand.hbm [shape: f32[768,128], index: 7, kind: input, shape index: {}]
  %s8 = inlined_call_operand.hbm [shape: f32[1,128], index: 8, kind: input, shape index: {}]
  %s9 = inlined_call_operand.hbm [shape: f32[8,128], index: 9, kind: output, shape index: {}]
  %s10 = sld [smem:[#allocation0]]
  $region86: #{tpu_custom_call.1} parent=0
    _
  %s12 = ssub.s32 1, %s10
  %s13 = scalar_select 0, %s12, %s10
  $region1: #{tpu_custom_call.1} parent=0
    #allocation3 [shape = 'u8[8192]{0}', space=vmem, size = 0x2000, scoped, tag = 'input window, operand 0, single buffered']
    #allocation4 [shape = 's32[1]{0}', space=sflag, size = 0x4, scoped, tag = 'scoped memory for tpu_custom_call.1']
    #allocation5 [shape = 's32[1]{0}', space=sflag, size = 0x4, scoped, tag = 'scoped memory for tpu_custom_call.1']
    #allocation6 [shape = 'u8[524288]{0}', space=vmem, size = 0x80000, scoped, tag = 'input window, operand 1, single buffered']
    #allocation7 [shape = 's32[1]{0}', space=sflag, size = 0x4, scoped, tag = 'scoped memory for tpu_custom_call.1']
    #allocation8 [shape = 'u8[2048]{0}', space=vmem, size = 0x800, scoped, tag = 'input window, operand 2, single buffered']
    #allocation9 [shape = 'u8[2048]{0}', space=vmem, size = 0x800, scoped, tag = 'input window, operand 3, single buffered']
    #allocation10 [shape = 's32[1]{0}', space=sflag, size = 0x4, scoped, tag = 'scoped memory for tpu_custom_call.1']
    #allocation11 [shape = 'u8[1572864]{0}', space=vmem, size = 0x180000, scoped, tag = 'input window, operand 4, single buffered']
    #allocation12 [shape = 'u8[3072]{0}', space=vmem, size = 0xc00, scoped, tag = 'input window, operand 5, single buffered']
    #allocation13 [shape = 's32[1]{0}', space=sflag, size = 0x4, scoped, tag = 'scoped memory for tpu_custom_call.1']
    #allocation14 [shape = 'u8[3072]{0}', space=vmem, size = 0xc00, scoped, tag = 'input window, operand 6, single buffered']
    #allocation15 [shape = 'u8[393216]{0}', space=vmem, size = 0x60000, scoped, tag = 'input window, operand 7, single buffered']
    #allocation16 [shape = 's32[1]{0}', space=sflag, size = 0x4, scoped, tag = 'scoped memory for tpu_custom_call.1']
    #allocation17 [shape = 'u8[512]{0}', space=vmem, size = 0x400, scoped, tag = 'input window, operand 8, single buffered']
    #allocation18 [shape = 'u8[4096]{0}', space=vmem, size = 0x1000, scoped, tag = 'output window, operand 0, single buffered']
    %14 = vsyncpa [#allocation4], 0
    %15 = vsyncpa [#allocation7], 0
    %16 = vsyncpa [#allocation10], 0
    %17 = vsyncpa [#allocation13], 0
    %18 = vsyncpa [#allocation16], 0
    %19 = vsyncpa [#allocation5], 0
    // Predicated region
    $region2: #{tpu_custom_call.1} parent=1 // pred_check
      _
    $region3: #{tpu_custom_call.1} parent=1 // pred_check_branch
      %21 = sbr.rel (0) target = $region5
    $region4: #{tpu_custom_call.1} parent=1 // pred_region
      %s23 = ssub.s32 256, 256
      %24 = vsyncadd [#allocation4], %s23
      %s26 = sshll.u32 [#allocation3], 4
      %s27 = int_to_ptr.vmem [resolvable:$true] %s26
      %29 = dma.hbm_to_vmem [thread:$0]  %s0, 256, %s27, [#allocation4]
    $region5: #{tpu_custom_call.1} parent=1 // pred_fallthru
      _
    // Predicated region
    $region6: #{tpu_custom_call.1} parent=1 // pred_check
      _
    $region7: #{tpu_custom_call.1} parent=1 // pred_check_branch
      %31 = sbr.rel (0) target = $region9
    $region8: #{tpu_custom_call.1} parent=1 // pred_region
      %s33 = ssub.s32 16384, 16384
      %34 = vsyncadd [#allocation7], %s33
      %s35 = sshll.u32 [#allocation6], 4
      %s36 = int_to_ptr.vmem [resolvable:$true] %s35
      %41 = dma.hbm_to_vmem [thread:$0]  %s1, 16384, %s36, [#allocation7], 512, 512, 32
    $region9: #{tpu_custom_call.1} parent=1 // pred_fallthru
      _
    // Predicated region
    $region10: #{tpu_custom_call.1} parent=1 // pred_check
      _
    $region11: #{tpu_custom_call.1} parent=1 // pred_check_branch
      %43 = sbr.rel (0) target = $region13
    $region12: #{tpu_custom_call.1} parent=1 // pred_region
      %s45 = ssub.s32 64, 64
      %46 = vsyncadd [#allocation7], %s45
      %s48 = sshll.u32 [#allocation8], 4
      %s49 = int_to_ptr.vmem [resolvable:$true] %s48
      %51 = dma.hbm_to_vmem [thread:$0]  %s2, 64, %s49, [#allocation7]
    $region13: #{tpu_custom_call.1} parent=1 // pred_fallthru
      _
    // Predicated region
    $region14: #{tpu_custom_call.1} parent=1 // pred_check
      _
    $region15: #{tpu_custom_call.1} parent=1 // pred_check_branch
      %53 = sbr.rel (0) target = $region17
    $region16: #{tpu_custom_call.1} parent=1 // pred_region
      %s55 = ssub.s32 64, 64
      %56 = vsyncadd [#allocation10], %s55
      %s58 = sshll.u32 [#allocation9], 4
      %s59 = int_to_ptr.vmem [resolvable:$true] %s58
      %61 = dma.hbm_to_vmem [thread:$0]  %s3, 64, %s59, [#allocation10]
    $region17: #{tpu_custom_call.1} parent=1 // pred_fallthru
      _
    // Predicated region
    $region18: #{tpu_custom_call.1} parent=1 // pred_check
      _
    $region19: #{tpu_custom_call.1} parent=1 // pred_check_branch
      %63 = sbr.rel (0) target = $region21
    $region20: #{tpu_custom_call.1} parent=1 // pred_region
      %s65 = ssub.s32 49152, 49152
      %66 = vsyncadd [#allocation10], %s65
      %s67 = sshll.u32 [#allocation11], 4
      %s68 = int_to_ptr.vmem [resolvable:$true] %s67
      %73 = dma.hbm_to_vmem [thread:$0]  %s4, 49152, %s68, [#allocation10], 768, 768, 48
    $region21: #{tpu_custom_call.1} parent=1 // pred_fallthru
      _
    // Predicated region
    $region22: #{tpu_custom_call.1} parent=1 // pred_check
      _
    $region23: #{tpu_custom_call.1} parent=1 // pred_check_branch
      %75 = sbr.rel (0) target = $region25
    $region24: #{tpu_custom_call.1} parent=1 // pred_region
      %s77 = ssub.s32 96, 96
      %78 = vsyncadd [#allocation13], %s77
      %s80 = sshll.u32 [#allocation12], 4
      %s81 = int_to_ptr.vmem [resolvable:$true] %s80
      %83 = dma.hbm_to_vmem [thread:$0]  %s5, 96, %s81, [#allocation13]
    $region25: #{tpu_custom_call.1} parent=1 // pred_fallthru
      _
    // Predicated region
    $region26: #{tpu_custom_call.1} parent=1 // pred_check
      _
    $region27: #{tpu_custom_call.1} parent=1 // pred_check_branch
      %85 = sbr.rel (0) target = $region29
    $region28: #{tpu_custom_call.1} parent=1 // pred_region
      %s87 = ssub.s32 96, 96
      %88 = vsyncadd [#allocation13], %s87
      %s90 = sshll.u32 [#allocation14], 4
      %s91 = int_to_ptr.vmem [resolvable:$true] %s90
      %93 = dma.hbm_to_vmem [thread:$0]  %s6, 96, %s91, [#allocation13]
    $region29: #{tpu_custom_call.1} parent=1 // pred_fallthru
      _
    // Predicated region
    $region30: #{tpu_custom_call.1} parent=1 // pred_check
      _
    $region31: #{tpu_custom_call.1} parent=1 // pred_check_branch
      %95 = sbr.rel (0) target = $region33
    $region32: #{tpu_custom_call.1} parent=1 // pred_region
      %s97 = ssub.s32 12288, 12288
      %98 = vsyncadd [#allocation16], %s97
      %s99 = sshll.u32 [#allocation15], 4
      %s100 = int_to_ptr.vmem [resolvable:$true] %s99
      %105 = dma.hbm_to_vmem [thread:$0]  %s7, 12288, %s100, [#allocation16], 128, 128, 8
    $region33: #{tpu_custom_call.1} parent=1 // pred_fallthru
      _
    // Predicated region
    $region34: #{tpu_custom_call.1} parent=1 // pred_check
      _
    $region35: #{tpu_custom_call.1} parent=1 // pred_check_branch
      %107 = sbr.rel (0) target = $region37
    $region36: #{tpu_custom_call.1} parent=1 // pred_region
      %s109 = ssub.s32 16, 16
      %110 = vsyncadd [#allocation16], %s109
      %s112 = sshll.u32 [#allocation17], 4
      %s113 = int_to_ptr.vmem [resolvable:$true] %s112
      %115 = dma.hbm_to_vmem [thread:$0]  %s8, 16, %s113, [#allocation16]
    $region37: #{tpu_custom_call.1} parent=1 // pred_fallthru
      _
    // Predicated region
    $region38: #{tpu_custom_call.1} parent=1 // pred_check
      _
    $region39: #{tpu_custom_call.1} parent=1 // pred_check_branch
      %117 = sbr.rel (0) target = $region41
    $region40: #{tpu_custom_call.1} parent=1 // pred_region
      %118 = dma.done [#allocation4], 256
    $region41: #{tpu_custom_call.1} parent=1 // pred_fallthru
      _
    // Predicated region
    $region42: #{tpu_custom_call.1} parent=1 // pred_check
      _
    $region43: #{tpu_custom_call.1} parent=1 // pred_check_branch
      %120 = sbr.rel (0) target = $region45
    $region44: #{tpu_custom_call.1} parent=1 // pred_region
      %121 = dma.done [#allocation7], 16384
    $region45: #{tpu_custom_call.1} parent=1 // pred_fallthru
      _
    // Predicated region
    $region46: #{tpu_custom_call.1} parent=1 // pred_check
      _
    $region47: #{tpu_custom_call.1} parent=1 // pred_check_branch
      %123 = sbr.rel (0) target = $region49
    $region48: #{tpu_custom_call.1} parent=1 // pred_region
      %124 = dma.done [#allocation7], 64
    $region49: #{tpu_custom_call.1} parent=1 // pred_fallthru
      _
    // Predicated region
    $region50: #{tpu_custom_call.1} parent=1 // pred_check
      _
    $region51: #{tpu_custom_call.1} parent=1 // pred_check_branch
      %126 = sbr.rel (0) target = $region53
    $region52: #{tpu_custom_call.1} parent=1 // pred_region
      %127 = dma.done [#allocation10], 64
    $region53: #{tpu_custom_call.1} parent=1 // pred_fallthru
      _
    // Predicated region
    $region54: #{tpu_custom_call.1} parent=1 // pred_check
      _
    $region55: #{tpu_custom_call.1} parent=1 // pred_check_branch
      %129 = sbr.rel (0) target = $region57
    $region56: #{tpu_custom_call.1} parent=1 // pred_region
      %130 = dma.done [#allocation10], 49152
    $region57: #{tpu_custom_call.1} parent=1 // pred_fallthru
      _
    // Predicated region
    $region58: #{tpu_custom_call.1} parent=1 // pred_check
      _
    $region59: #{tpu_custom_call.1} parent=1 // pred_check_branch
      %132 = sbr.rel (0) target = $region61
    $region60: #{tpu_custom_call.1} parent=1 // pred_region
      %133 = dma.done [#allocation13], 96
    $region61: #{tpu_custom_call.1} parent=1 // pred_fallthru
      _
    // Predicated region
    $region62: #{tpu_custom_call.1} parent=1 // pred_check
      _
    $region63: #{tpu_custom_call.1} parent=1 // pred_check_branch
      %135 = sbr.rel (0) target = $region65
    $region64: #{tpu_custom_call.1} parent=1 // pred_region
      %136 = dma.done [#allocation13], 96
    $region65: #{tpu_custom_call.1} parent=1 // pred_fallthru
      _
    // Predicated region
    $region66: #{tpu_custom_call.1} parent=1 // pred_check
      _
    $region67: #{tpu_custom_call.1} parent=1 // pred_check_branch
      %138 = sbr.rel (0) target = $region69
    $region68: #{tpu_custom_call.1} parent=1 // pred_region
      %139 = dma.done [#allocation16], 12288
    $region69: #{tpu_custom_call.1} parent=1 // pred_fallthru
      _
    // Predicated region
    $region70: #{tpu_custom_call.1} parent=1 // pred_check
      _
    $region71: #{tpu_custom_call.1} parent=1 // pred_check_branch
      %141 = sbr.rel (0) target = $region73
    $region72: #{tpu_custom_call.1} parent=1 // pred_region
      %142 = dma.done [#allocation16], 16
    $region73: #{tpu_custom_call.1} parent=1 // pred_fallthru
      _
    %v143 = vld [vmem:[#allocation3] sm:$0xff]
    %v144 = vld [vmem:[#allocation3 + $0x8] sm:$0xff]
    %v145 = vmax.f32 %v143, 0.0
    %v146 = vmax.f32 %v144, 0.0
    %v147 = vld [vmem:[#allocation6] sm:$0xff]
    %v148 = vld [vmem:[#allocation6 + $0x8] sm:$0xff]
    %v149 = vld [vmem:[#allocation6 + $0x10] sm:$0xff]
    %v150 = vld [vmem:[#allocation6 + $0x18] sm:$0xff]
    %v151 = vld [vmem:[#allocation6 + $0x20] sm:$0xff]
    %v152 = vld [vmem:[#allocation6 + $0x28] sm:$0xff]
    %v153 = vld [vmem:[#allocation6 + $0x30] sm:$0xff]
    %v154 = vld [vmem:[#allocation6 + $0x38] sm:$0xff]
    %v155 = vld [vmem:[#allocation6 + $0x40] sm:$0xff]
    %v156 = vld [vmem:[#allocation6 + $0x48] sm:$0xff]
    %v157 = vld [vmem:[#allocation6 + $0x50] sm:$0xff]
    %v158 = vld [vmem:[#allocation6 + $0x58] sm:$0xff]
    %v159 = vld [vmem:[#allocation6 + $0x60] sm:$0xff]
    %v160 = vld [vmem:[#allocation6 + $0x68] sm:$0xff]
    %v161 = vld [vmem:[#allocation6 + $0x70] sm:$0xff]
    %v162 = vld [vmem:[#allocation6 + $0x78] sm:$0xff]
    %v163 = vld [vmem:[#allocation6 + $0x80] sm:$0xff]
    %v164 = vld [vmem:[#allocation6 + $0x88] sm:$0xff]
    %v165 = vld [vmem:[#allocation6 + $0x90] sm:$0xff]
    %v166 = vld [vmem:[#allocation6 + $0x98] sm:$0xff]
    %v167 = vld [vmem:[#allocation6 + $0xa0] sm:$0xff]
    %v168 = vld [vmem:[#allocation6 + $0xa8] sm:$0xff]
    %v169 = vld [vmem:[#allocation6 + $0xb0] sm:$0xff]
    %v170 = vld [vmem:[#allocation6 + $0xb8] sm:$0xff]
    %v171 = vld [vmem:[#allocation6 + $0xc0] sm:$0xff]
    %v172 = vld [vmem:[#allocation6 + $0xc8] sm:$0xff]
    %v173 = vld [vmem:[#allocation6 + $0xd0] sm:$0xff]
    %v174 = vld [vmem:[#allocation6 + $0xd8] sm:$0xff]
    %v175 = vld [vmem:[#allocation6 + $0xe0] sm:$0xff]
    %v176 = vld [vmem:[#allocation6 + $0xe8] sm:$0xff]
    %v177 = vld [vmem:[#allocation6 + $0xf0] sm:$0xff]
    %v178 = vld [vmem:[#allocation6 + $0xf8] sm:$0xff]
    %v179 = vld [vmem:[#allocation6 + $0x100] sm:$0xff]
    %v180 = vld [vmem:[#allocation6 + $0x108] sm:$0xff]
    %v181 = vld [vmem:[#allocation6 + $0x110] sm:$0xff]
    %v182 = vld [vmem:[#allocation6 + $0x118] sm:$0xff]
    %v183 = vld [vmem:[#allocation6 + $0x120] sm:$0xff]
    %v184 = vld [vmem:[#allocation6 + $0x128] sm:$0xff]
    %v185 = vld [vmem:[#allocation6 + $0x130] sm:$0xff]
    %v186 = vld [vmem:[#allocation6 + $0x138] sm:$0xff]
    %v187 = vld [vmem:[#allocation6 + $0x140] sm:$0xff]
    %v188 = vld [vmem:[#allocation6 + $0x148] sm:$0xff]
    %v189 = vld [vmem:[#allocation6 + $0x150] sm:$0xff]
    %v190 = vld [vmem:[#allocation6 + $0x158] sm:$0xff]
    %v191 = vld [vmem:[#allocation6 + $0x160] sm:$0xff]
    %v192 = vld [vmem:[#allocation6 + $0x168] sm:$0xff]
    %v193 = vld [vmem:[#allocation6 + $0x170] sm:$0xff]
    %v194 = vld [vmem:[#allocation6 + $0x178] sm:$0xff]
    %v195 = vld [vmem:[#allocation6 + $0x180] sm:$0xff]
    %v196 = vld [vmem:[#allocation6 + $0x188] sm:$0xff]
    %v197 = vld [vmem:[#allocation6 + $0x190] sm:$0xff]
    %v198 = vld [vmem:[#allocation6 + $0x198] sm:$0xff]
    %v199 = vld [vmem:[#allocation6 + $0x1a0] sm:$0xff]
    %v200 = vld [vmem:[#allocation6 + $0x1a8] sm:$0xff]
    %v201 = vld [vmem:[#allocation6 + $0x1b0] sm:$0xff]
    %v202 = vld [vmem:[#allocation6 + $0x1b8] sm:$0xff]
    %v203 = vld [vmem:[#allocation6 + $0x1c0] sm:$0xff]
    %v204 = vld [vmem:[#allocation6 + $0x1c8] sm:$0xff]
    %v205 = vld [vmem:[#allocation6 + $0x1d0] sm:$0xff]
    %v206 = vld [vmem:[#allocation6 + $0x1d8] sm:$0xff]
    %v207 = vld [vmem:[#allocation6 + $0x1e0] sm:$0xff]
    %v208 = vld [vmem:[#allocation6 + $0x1e8] sm:$0xff]
    %v209 = vld [vmem:[#allocation6 + $0x1f0] sm:$0xff]
    %v210 = vld [vmem:[#allocation6 + $0x1f8] sm:$0xff]
    %v211 = vld [vmem:[#allocation6 + $0x200] sm:$0xff]
    %v212 = vld [vmem:[#allocation6 + $0x208] sm:$0xff]
    %v213 = vld [vmem:[#allocation6 + $0x210] sm:$0xff]
    %v214 = vld [vmem:[#allocation6 + $0x218] sm:$0xff]
    %v215 = vld [vmem:[#allocation6 + $0x220] sm:$0xff]
    %v216 = vld [vmem:[#allocation6 + $0x228] sm:$0xff]
    %v217 = vld [vmem:[#allocation6 + $0x230] sm:$0xff]
    %v218 = vld [vmem:[#allocation6 + $0x238] sm:$0xff]
    %v219 = vld [vmem:[#allocation6 + $0x240] sm:$0xff]
    %v220 = vld [vmem:[#allocation6 + $0x248] sm:$0xff]
    %v221 = vld [vmem:[#allocation6 + $0x250] sm:$0xff]
    %v222 = vld [vmem:[#allocation6 + $0x258] sm:$0xff]
    %v223 = vld [vmem:[#allocation6 + $0x260] sm:$0xff]
    %v224 = vld [vmem:[#allocation6 + $0x268] sm:$0xff]
    %v225 = vld [vmem:[#allocation6 + $0x270] sm:$0xff]
    %v226 = vld [vmem:[#allocation6 + $0x278] sm:$0xff]
    %v227 = vld [vmem:[#allocation6 + $0x280] sm:$0xff]
    %v228 = vld [vmem:[#allocation6 + $0x288] sm:$0xff]
    %v229 = vld [vmem:[#allocation6 + $0x290] sm:$0xff]
    %v230 = vld [vmem:[#allocation6 + $0x298] sm:$0xff]
    %v231 = vld [vmem:[#allocation6 + $0x2a0] sm:$0xff]
    %v232 = vld [vmem:[#allocation6 + $0x2a8] sm:$0xff]
    %v233 = vld [vmem:[#allocation6 + $0x2b0] sm:$0xff]
    %v234 = vld [vmem:[#allocation6 + $0x2b8] sm:$0xff]
    %v235 = vld [vmem:[#allocation6 + $0x2c0] sm:$0xff]
    %v236 = vld [vmem:[#allocation6 + $0x2c8] sm:$0xff]
    %v237 = vld [vmem:[#allocation6 + $0x2d0] sm:$0xff]
    %v238 = vld [vmem:[#allocation6 + $0x2d8] sm:$0xff]
    %v239 = vld [vmem:[#allocation6 + $0x2e0] sm:$0xff]
    %v240 = vld [vmem:[#allocation6 + $0x2e8] sm:$0xff]
    %v241 = vld [vmem:[#allocation6 + $0x2f0] sm:$0xff]
    %v242 = vld [vmem:[#allocation6 + $0x2f8] sm:$0xff]
    %v243 = vld [vmem:[#allocation6 + $0x300] sm:$0xff]
    %v244 = vld [vmem:[#allocation6 + $0x308] sm:$0xff]
    %v245 = vld [vmem:[#allocation6 + $0x310] sm:$0xff]
    %v246 = vld [vmem:[#allocation6 + $0x318] sm:$0xff]
    %v247 = vld [vmem:[#allocation6 + $0x320] sm:$0xff]
    %v248 = vld [vmem:[#allocation6 + $0x328] sm:$0xff]
    %v249 = vld [vmem:[#allocation6 + $0x330] sm:$0xff]
    %v250 = vld [vmem:[#allocation6 + $0x338] sm:$0xff]
    %v251 = vld [vmem:[#allocation6 + $0x340] sm:$0xff]
    %v252 = vld [vmem:[#allocation6 + $0x348] sm:$0xff]
    %v253 = vld [vmem:[#allocation6 + $0x350] sm:$0xff]
    %v254 = vld [vmem:[#allocation6 + $0x358] sm:$0xff]
    %v255 = vld [vmem:[#allocation6 + $0x360] sm:$0xff]
    %v256 = vld [vmem:[#allocation6 + $0x368] sm:$0xff]
    %v257 = vld [vmem:[#allocation6 + $0x370] sm:$0xff]
    %v258 = vld [vmem:[#allocation6 + $0x378] sm:$0xff]
    %v259 = vld [vmem:[#allocation6 + $0x380] sm:$0xff]
    %v260 = vld [vmem:[#allocation6 + $0x388] sm:$0xff]
    %v261 = vld [vmem:[#allocation6 + $0x390] sm:$0xff]
    %v262 = vld [vmem:[#allocation6 + $0x398] sm:$0xff]
    %v263 = vld [vmem:[#allocation6 + $0x3a0] sm:$0xff]
    %v264 = vld [vmem:[#allocation6 + $0x3a8] sm:$0xff]
    %v265 = vld [vmem:[#allocation6 + $0x3b0] sm:$0xff]
    %v266 = vld [vmem:[#allocation6 + $0x3b8] sm:$0xff]
    %v267 = vld [vmem:[#allocation6 + $0x3c0] sm:$0xff]
    %v268 = vld [vmem:[#allocation6 + $0x3c8] sm:$0xff]
    %v269 = vld [vmem:[#allocation6 + $0x3d0] sm:$0xff]
    %v270 = vld [vmem:[#allocation6 + $0x3d8] sm:$0xff]
    %v271 = vld [vmem:[#allocation6 + $0x3e0] sm:$0xff]
    %v272 = vld [vmem:[#allocation6 + $0x3e8] sm:$0xff]
    %v273 = vld [vmem:[#allocation6 + $0x3f0] sm:$0xff]
    %v274 = vld [vmem:[#allocation6 + $0x3f8] sm:$0xff]
    %275 = vmatprep.subr.mxu0 %v148
    %276 = vmatpush1.msra.mxu0 %v147
    %277 = vmatprep.subr.mxu0 %v152
    %278 = vmatpush1.msra.mxu0 %v151
    %279 = vmatprep.subr.mxu0 %v156
    %280 = vmatpush1.msra.mxu0 %v155
    %281 = vmatprep.subr.mxu0 %v160
    %282 = vmatpush1.msra.mxu0 %v159
    %283 = vmatprep.subr.mxu0 %v164
    %284 = vmatpush1.msra.mxu0 %v163
    %285 = vmatprep.subr.mxu0 %v168
    %286 = vmatpush1.msra.mxu0 %v167
    %287 = vmatprep.subr.mxu0 %v172
    %288 = vmatpush1.msra.mxu0 %v171
    %289 = vmatprep.subr.mxu0 %v176
    %290 = vmatpush1.msra.mxu0 %v175
    %291 = vmatprep.subr.mxu0 %v180
    %292 = vmatpush1.msra.mxu0 %v179
    %293 = vmatprep.subr.mxu0 %v184
    %294 = vmatpush1.msra.mxu0 %v183
    %295 = vmatprep.subr.mxu0 %v188
    %296 = vmatpush1.msra.mxu0 %v187
    %297 = vmatprep.subr.mxu0 %v192
    %298 = vmatpush1.msra.mxu0 %v191
    %299 = vmatprep.subr.mxu0 %v196
    %300 = vmatpush1.msra.mxu0 %v195
    %301 = vmatprep.subr.mxu0 %v200
    %302 = vmatpush1.msra.mxu0 %v199
    %303 = vmatprep.subr.mxu0 %v204
    %304 = vmatpush1.msra.mxu0 %v203
    %305 = vmatprep.subr.mxu0 %v208
    %306 = vmatpush1.msra.mxu0 %v207
    %307 = vmatprep.subr.mxu0 %v212
    %308 = vmatpush1.msra.mxu0 %v211
    %309 = vmatprep.subr.mxu0 %v216
    %310 = vmatpush1.msra.mxu0 %v215
    %311 = vmatprep.subr.mxu0 %v220
    %312 = vmatpush1.msra.mxu0 %v219
    %313 = vmatprep.subr.mxu0 %v224
    %314 = vmatpush1.msra.mxu0 %v223
    %315 = vmatprep.subr.mxu0 %v228
    %316 = vmatpush1.msra.mxu0 %v227
    %317 = vmatprep.subr.mxu0 %v232
    %318 = vmatpush1.msra.mxu0 %v231
    %319 = vmatprep.subr.mxu0 %v236
    %320 = vmatpush1.msra.mxu0 %v235
    %321 = vmatprep.subr.mxu0 %v240
    %322 = vmatpush1.msra.mxu0 %v239
    %323 = vmatprep.subr.mxu0 %v244
    %324 = vmatpush1.msra.mxu0 %v243
    %325 = vmatprep.subr.mxu0 %v248
    %326 = vmatpush1.msra.mxu0 %v247
    %327 = vmatprep.subr.mxu0 %v252
    %328 = vmatpush1.msra.mxu0 %v251
    %329 = vmatprep.subr.mxu0 %v256
    %330 = vmatpush1.msra.mxu0 %v255
    %331 = vmatprep.subr.mxu0 %v260
    %332 = vmatpush1.msra.mxu0 %v259
    %333 = vmatprep.subr.mxu0 %v264
    %334 = vmatpush1.msra.mxu0 %v263
    %335 = vmatprep.subr.mxu0 %v268
    %336 = vmatpush1.msra.mxu0 %v267
    %337 = vmatprep.subr.mxu0 %v272
    %338 = vmatpush1.msra.mxu0 %v271
    %339 = vmatprep.mubr.f32.mxu0 %v146
    %340 = vmatmul.mubr.f32.gmra.mrb[0].mxu0 %v145
    %v341 = vpop.f32.mrb[0].mxu0
    %v342 = vadd.f32 0.0, %v341
    %v343 = vpop.f32.mrb[0].mxu0
    %v344 = vadd.f32 0.0, %v343
    %345 = vdwg.mxu0
    %346 = vmatprep.subr.mxu0 %v150
    %347 = vmatpush1.msra.mxu0 %v149
    %348 = vmatprep.subr.mxu0 %v154
    %349 = vmatpush1.msra.mxu0 %v153
    %350 = vmatprep.subr.mxu0 %v158
    %351 = vmatpush1.msra.mxu0 %v157
    %352 = vmatprep.subr.mxu0 %v162
    %353 = vmatpush1.msra.mxu0 %v161
    %354 = vmatprep.subr.mxu0 %v166
    %355 = vmatpush1.msra.mxu0 %v165
    %356 = vmatprep.subr.mxu0 %v170
    %357 = vmatpush1.msra.mxu0 %v169
    %358 = vmatprep.subr.mxu0 %v174
    %359 = vmatpush1.msra.mxu0 %v173
    %360 = vmatprep.subr.mxu0 %v178
    %361 = vmatpush1.msra.mxu0 %v177
    %362 = vmatprep.subr.mxu0 %v182
    %363 = vmatpush1.msra.mxu0 %v181
    %364 = vmatprep.subr.mxu0 %v186
    %365 = vmatpush1.msra.mxu0 %v185
    %366 = vmatprep.subr.mxu0 %v190
    %367 = vmatpush1.msra.mxu0 %v189
    %368 = vmatprep.subr.mxu0 %v194
    %369 = vmatpush1.msra.mxu0 %v193
    %370 = vmatprep.subr.mxu0 %v198
    %371 = vmatpush1.msra.mxu0 %v197
    %372 = vmatprep.subr.mxu0 %v202
    %373 = vmatpush1.msra.mxu0 %v201
    %374 = vmatprep.subr.mxu0 %v206
    %375 = vmatpush1.msra.mxu0 %v205
    %376 = vmatprep.subr.mxu0 %v210
    %377 = vmatpush1.msra.mxu0 %v209
    %378 = vmatprep.subr.mxu0 %v214
    %379 = vmatpush1.msra.mxu0 %v213
    %380 = vmatprep.subr.mxu0 %v218
    %381 = vmatpush1.msra.mxu0 %v217
    %382 = vmatprep.subr.mxu0 %v222
    %383 = vmatpush1.msra.mxu0 %v221
    %384 = vmatprep.subr.mxu0 %v226
    %385 = vmatpush1.msra.mxu0 %v225
    %386 = vmatprep.subr.mxu0 %v230
    %387 = vmatpush1.msra.mxu0 %v229
    %388 = vmatprep.subr.mxu0 %v234
    %389 = vmatpush1.msra.mxu0 %v233
    %390 = vmatprep.subr.mxu0 %v238
    %391 = vmatpush1.msra.mxu0 %v237
    %392 = vmatprep.subr.mxu0 %v242
    %393 = vmatpush1.msra.mxu0 %v241
    %394 = vmatprep.subr.mxu0 %v246
    %395 = vmatpush1.msra.mxu0 %v245
    %396 = vmatprep.subr.mxu0 %v250
    %397 = vmatpush1.msra.mxu0 %v249
    %398 = vmatprep.subr.mxu0 %v254
    %399 = vmatpush1.msra.mxu0 %v253
    %400 = vmatprep.subr.mxu0 %v258
    %401 = vmatpush1.msra.mxu0 %v257
    %402 = vmatprep.subr.mxu0 %v262
    %403 = vmatpush1.msra.mxu0 %v261
    %404 = vmatprep.subr.mxu0 %v266
    %405 = vmatpush1.msra.mxu0 %v265
    %406 = vmatprep.subr.mxu0 %v270
    %407 = vmatpush1.msra.mxu0 %v269
    %408 = vmatprep.subr.mxu0 %v274
    %409 = vmatpush1.msra.mxu0 %v273
    %410 = vmatprep.mubr.f32.mxu0 %v146
    %411 = vmatmul.mubr.f32.gmra.mrb[0].mxu0 %v145
    %v412 = vpop.f32.mrb[0].mxu0
    %v413 = vadd.f32 0.0, %v412
    %v414 = vpop.f32.mrb[0].mxu0
    %v415 = vadd.f32 0.0, %v414
    %416 = vdwg.mxu0
    %s417 = smul.u32 0, 8
    %s418 = sshra.s32 %s417, 3
    %s419 = sand.u32 %s417, 7
    %s420 = smul.u32 %s418, 4
    %s421 = smul.addr %s420, 8
    %s422 = scalar_lea.vmem [#allocation2], %s421
    %423 = vst [vmem:[%s422] sm:$0xff] %v342
    %424 = vst [vmem:[%s422 + $0x8] sm:$0xff] %v344
    %425 = vst [vmem:[%s422 + $0x10] sm:$0xff] %v413
    %426 = vst [vmem:[%s422 + $0x18] sm:$0xff] %v415
    %p427 = scmp.eq.s32.totalorder 0, 0
    // Predicated region
    $region74: #{tpu_custom_call.1} parent=1 // pred_check
      %p428 = pneg %p427
    $region75: #{tpu_custom_call.1} parent=1 // pred_check_branch
      %430 = sbr.rel (%p428) target = $region77
    $region76: #{tpu_custom_call.1} parent=1 // pred_region
      %v431 = vld [vmem:[#allocation2] sm:$0xff]
      %v432 = vld [vmem:[#allocation2 + $0x8] sm:$0xff]
      %v433 = vld [vmem:[#allocation2 + $0x10] sm:$0xff]
      %v434 = vld [vmem:[#allocation2 + $0x18] sm:$0xff]
      %v435 = vrot.slane %v431, 4
      %v436 = vadd.f32 %v431, %v435
      %v437 = vrot.slane %v436, 2
      %v438 = vadd.f32 %v436, %v437
      %v439 = vrot.slane %v438, 1
      %v440 = vadd.f32 %v438, %v439
      %v441 = vrot.slane %v432, 4
      %v442 = vadd.f32 %v432, %v441
      %v443 = vrot.slane %v442, 2
      %v444 = vadd.f32 %v442, %v443
      %v445 = vrot.slane %v444, 1
      %v446 = vadd.f32 %v444, %v445
      %v447 = vrot.slane %v433, 4
      %v448 = vadd.f32 %v433, %v447
      %v449 = vrot.slane %v448, 2
      %v450 = vadd.f32 %v448, %v449
      %v451 = vrot.slane %v450, 1
      %v452 = vadd.f32 %v450, %v451
      %v453 = vrot.slane %v434, 4
      %v454 = vadd.f32 %v434, %v453
      %v455 = vrot.slane %v454, 2
      %v456 = vadd.f32 %v454, %v455
      %v457 = vrot.slane %v456, 1
      %v458 = vadd.f32 %v456, %v457
      %v459 = vmul.f32 %v431, %v431
      %v460 = vmul.f32 %v432, %v432
      %v461 = vmul.f32 %v433, %v433
      %v462 = vmul.f32 %v434, %v434
      %v463 = vrot.slane %v459, 4
      %v464 = vadd.f32 %v459, %v463
      %v465 = vrot.slane %v464, 2
      %v466 = vadd.f32 %v464, %v465
      %v467 = vrot.slane %v466, 1
      %v468 = vadd.f32 %v466, %v467
      %v469 = vrot.slane %v460, 4
      %v470 = vadd.f32 %v460, %v469
      %v471 = vrot.slane %v470, 2
      %v472 = vadd.f32 %v470, %v471
      %v473 = vrot.slane %v472, 1
      %v474 = vadd.f32 %v472, %v473
      %v475 = vrot.slane %v461, 4
      %v476 = vadd.f32 %v461, %v475
      %v477 = vrot.slane %v476, 2
      %v478 = vadd.f32 %v476, %v477
      %v479 = vrot.slane %v478, 1
      %v480 = vadd.f32 %v478, %v479
      %v481 = vrot.slane %v462, 4
      %v482 = vadd.f32 %v462, %v481
      %v483 = vrot.slane %v482, 2
      %v484 = vadd.f32 %v482, %v483
      %v485 = vrot.slane %v484, 1
      %v486 = vadd.f32 %v484, %v485
      %v487 = vadd.f32 %v440, %v446
      %v488 = vadd.f32 %v487, %v452
      %v489 = vadd.f32 %v488, %v458
      %v490 = vadd.f32 %v468, %v474
      %v491 = vadd.f32 %v490, %v480
      %v492 = vadd.f32 %v491, %v486
      %v493 = vrcp.pop 8.0
      %v494 = vmul.f32 %v489, %v493
      %v495 = vmul.f32 %v492, %v493
      %v496 = vmul.f32 %v494, %v494
      %v497 = vsub.f32 %v495, %v496
      %v498 = vadd.f32 %v497, 1e-05
      %v499 = vrsqrt.pop %v498
      %v500 = vlaneseq
      %v501 = vshrl.u32 %v500, 7
      %v502 = vsub.s32 0, %v501
      %v503 = vrot.slane %v494, %v502
      %v504 = vsub.f32 %v431, %v503
      %v505 = vsub.f32 %v432, %v503
      %v506 = vsub.f32 %v433, %v503
      %v507 = vsub.f32 %v434, %v503
      %v508 = vlaneseq
      %v509 = vshrl.u32 %v508, 7
      %v510 = vsub.s32 0, %v509
      %v511 = vrot.slane %v499, %v510
      %v512 = vmul.f32 %v504, %v511
      %v513 = vmul.f32 %v505, %v511
      %v514 = vmul.f32 %v506, %v511
      %v515 = vmul.f32 %v507, %v511
      %v516 = vld [vmem:[#allocation8] sm:$0xf]
      %v518 = vlaneseq
      %v519 = vshrl.u32 %v518, 7
      %v520 = vsub.s32 0, %v519
      %v521 = vrot.slane %v516, %v520
      %v522 = vlaneseq
      %v523 = vshrl.u32 %v522, 7
      %v524 = vsub.s32 1, %v523
      %v525 = vrot.slane %v516, %v524
      %v526 = vlaneseq
      %v527 = vshrl.u32 %v526, 7
      %v528 = vsub.s32 2, %v527
      %v529 = vrot.slane %v516, %v528
      %v530 = vlaneseq
      %v531 = vshrl.u32 %v530, 7
      %v532 = vsub.s32 3, %v531
      %v533 = vrot.slane %v516, %v532
      %v538 = vmul.f32 %v512, %v521
      %v539 = vmul.f32 %v513, %v525
      %v540 = vmul.f32 %v514, %v529
      %v541 = vmul.f32 %v515, %v533
      %v542 = vld [vmem:[#allocation9] sm:$0xf]
      %v544 = vlaneseq
      %v545 = vshrl.u32 %v544, 7
      %v546 = vsub.s32 0, %v545
      %v547 = vrot.slane %v542, %v546
      %v548 = vlaneseq
      %v549 = vshrl.u32 %v548, 7
      %v550 = vsub.s32 1, %v549
      %v551 = vrot.slane %v542, %v550
      %v552 = vlaneseq
      %v553 = vshrl.u32 %v552, 7
      %v554 = vsub.s32 2, %v553
      %v555 = vrot.slane %v542, %v554
      %v556 = vlaneseq
      %v557 = vshrl.u32 %v556, 7
      %v558 = vsub.s32 3, %v557
      %v559 = vrot.slane %v542, %v558
      %v564 = vadd.f32 %v538, %v547
      %v565 = vadd.f32 %v539, %v551
      %v566 = vadd.f32 %v540, %v555
      %v567 = vadd.f32 %v541, %v559
      %v568 = vmax.f32 %v564, 0.0
      %v569 = vmax.f32 %v565, 0.0
      %v570 = vmax.f32 %v566, 0.0
      %v571 = vmax.f32 %v567, 0.0
      %v572 = vld [vmem:[#allocation11] sm:$0xff]
      %v573 = vld [vmem:[#allocation11 + $0x8] sm:$0xff]
      %v574 = vld [vmem:[#allocation11 + $0x10] sm:$0xff]
      %v575 = vld [vmem:[#allocation11 + $0x18] sm:$0xff]
      %v576 = vld [vmem:[#allocation11 + $0x20] sm:$0xff]
      %v577 = vld [vmem:[#allocation11 + $0x28] sm:$0xff]
      %v578 = vld [vmem:[#allocation11 + $0x30] sm:$0xff]
      %v579 = vld [vmem:[#allocation11 + $0x38] sm:$0xff]
      %v580 = vld [vmem:[#allocation11 + $0x40] sm:$0xff]
      %v581 = vld [vmem:[#allocation11 + $0x48] sm:$0xff]
      %v582 = vld [vmem:[#allocation11 + $0x50] sm:$0xff]
      %v583 = vld [vmem:[#allocation11 + $0x58] sm:$0xff]
      %v584 = vld [vmem:[#allocation11 + $0x60] sm:$0xff]
      %v585 = vld [vmem:[#allocation11 + $0x68] sm:$0xff]
      %v586 = vld [vmem:[#allocation11 + $0x70] sm:$0xff]
      %v587 = vld [vmem:[#allocation11 + $0x78] sm:$0xff]
      %v588 = vld [vmem:[#allocation11 + $0x80] sm:$0xff]
      %v589 = vld [vmem:[#allocation11 + $0x88] sm:$0xff]
      %v590 = vld [vmem:[#allocation11 + $0x90] sm:$0xff]
      %v591 = vld [vmem:[#allocation11 + $0x98] sm:$0xff]
      %v592 = vld [vmem:[#allocation11 + $0xa0] sm:$0xff]
      %v593 = vld [vmem:[#allocation11 + $0xa8] sm:$0xff]
      %v594 = vld [vmem:[#allocation11 + $0xb0] sm:$0xff]
      %v595 = vld [vmem:[#allocation11 + $0xb8] sm:$0xff]
      %v596 = vld [vmem:[#allocation11 + $0xc0] sm:$0xff]
      %v597 = vld [vmem:[#allocation11 + $0xc8] sm:$0xff]
      %v598 = vld [vmem:[#allocation11 + $0xd0] sm:$0xff]
      %v599 = vld [vmem:[#allocation11 + $0xd8] sm:$0xff]
      %v600 = vld [vmem:[#allocation11 + $0xe0] sm:$0xff]
      %v601 = vld [vmem:[#allocation11 + $0xe8] sm:$0xff]
      %v602 = vld [vmem:[#allocation11 + $0xf0] sm:$0xff]
      %v603 = vld [vmem:[#allocation11 + $0xf8] sm:$0xff]
      %v604 = vld [vmem:[#allocation11 + $0x100] sm:$0xff]
      %v605 = vld [vmem:[#allocation11 + $0x108] sm:$0xff]
      %v606 = vld [vmem:[#allocation11 + $0x110] sm:$0xff]
      %v607 = vld [vmem:[#allocation11 + $0x118] sm:$0xff]
      %v608 = vld [vmem:[#allocation11 + $0x120] sm:$0xff]
      %v609 = vld [vmem:[#allocation11 + $0x128] sm:$0xff]
      %v610 = vld [vmem:[#allocation11 + $0x130] sm:$0xff]
      %v611 = vld [vmem:[#allocation11 + $0x138] sm:$0xff]
      %v612 = vld [vmem:[#allocation11 + $0x140] sm:$0xff]
      %v613 = vld [vmem:[#allocation11 + $0x148] sm:$0xff]
      %v614 = vld [vmem:[#allocation11 + $0x150] sm:$0xff]
      %v615 = vld [vmem:[#allocation11 + $0x158] sm:$0xff]
      %v616 = vld [vmem:[#allocation11 + $0x160] sm:$0xff]
      %v617 = vld [vmem:[#allocation11 + $0x168] sm:$0xff]
      %v618 = vld [vmem:[#allocation11 + $0x170] sm:$0xff]
      %v619 = vld [vmem:[#allocation11 + $0x178] sm:$0xff]
      %v620 = vld [vmem:[#allocation11 + $0x180] sm:$0xff]
      %v621 = vld [vmem:[#allocation11 + $0x188] sm:$0xff]
      %v622 = vld [vmem:[#allocation11 + $0x190] sm:$0xff]
      %v623 = vld [vmem:[#allocation11 + $0x198] sm:$0xff]
      %v624 = vld [vmem:[#allocation11 + $0x1a0] sm:$0xff]
      %v625 = vld [vmem:[#allocation11 + $0x1a8] sm:$0xff]
      %v626 = vld [vmem:[#allocation11 + $0x1b0] sm:$0xff]
      %v627 = vld [vmem:[#allocation11 + $0x1b8] sm:$0xff]
      %v628 = vld [vmem:[#allocation11 + $0x1c0] sm:$0xff]
      %v629 = vld [vmem:[#allocation11 + $0x1c8] sm:$0xff]
      %v630 = vld [vmem:[#allocation11 + $0x1d0] sm:$0xff]
      %v631 = vld [vmem:[#allocation11 + $0x1d8] sm:$0xff]
      %v632 = vld [vmem:[#allocation11 + $0x1e0] sm:$0xff]
      %v633 = vld [vmem:[#allocation11 + $0x1e8] sm:$0xff]
      %v634 = vld [vmem:[#allocation11 + $0x1f0] sm:$0xff]
      %v635 = vld [vmem:[#allocation11 + $0x1f8] sm:$0xff]
      %v636 = vld [vmem:[#allocation11 + $0x200] sm:$0xff]
      %v637 = vld [vmem:[#allocation11 + $0x208] sm:$0xff]
      %v638 = vld [vmem:[#allocation11 + $0x210] sm:$0xff]
      %v639 = vld [vmem:[#allocation11 + $0x218] sm:$0xff]
      %v640 = vld [vmem:[#allocation11 + $0x220] sm:$0xff]
      %v641 = vld [vmem:[#allocation11 + $0x228] sm:$0xff]
      %v642 = vld [vmem:[#allocation11 + $0x230] sm:$0xff]
      %v643 = vld [vmem:[#allocation11 + $0x238] sm:$0xff]
      %v644 = vld [vmem:[#allocation11 + $0x240] sm:$0xff]
      %v645 = vld [vmem:[#allocation11 + $0x248] sm:$0xff]
      %v646 = vld [vmem:[#allocation11 + $0x250] sm:$0xff]
      %v647 = vld [vmem:[#allocation11 + $0x258] sm:$0xff]
      %v648 = vld [vmem:[#allocation11 + $0x260] sm:$0xff]
      %v649 = vld [vmem:[#allocation11 + $0x268] sm:$0xff]
      %v650 = vld [vmem:[#allocation11 + $0x270] sm:$0xff]
      %v651 = vld [vmem:[#allocation11 + $0x278] sm:$0xff]
      %v652 = vld [vmem:[#allocation11 + $0x280] sm:$0xff]
      %v653 = vld [vmem:[#allocation11 + $0x288] sm:$0xff]
      %v654 = vld [vmem:[#allocation11 + $0x290] sm:$0xff]
      %v655 = vld [vmem:[#allocation11 + $0x298] sm:$0xff]
      %v656 = vld [vmem:[#allocation11 + $0x2a0] sm:$0xff]
      %v657 = vld [vmem:[#allocation11 + $0x2a8] sm:$0xff]
      %v658 = vld [vmem:[#allocation11 + $0x2b0] sm:$0xff]
      %v659 = vld [vmem:[#allocation11 + $0x2b8] sm:$0xff]
      %v660 = vld [vmem:[#allocation11 + $0x2c0] sm:$0xff]
      %v661 = vld [vmem:[#allocation11 + $0x2c8] sm:$0xff]
      %v662 = vld [vmem:[#allocation11 + $0x2d0] sm:$0xff]
      %v663 = vld [vmem:[#allocation11 + $0x2d8] sm:$0xff]
      %v664 = vld [vmem:[#allocation11 + $0x2e0] sm:$0xff]
      %v665 = vld [vmem:[#allocation11 + $0x2e8] sm:$0xff]
      %v666 = vld [vmem:[#allocation11 + $0x2f0] sm:$0xff]
      %v667 = vld [vmem:[#allocation11 + $0x2f8] sm:$0xff]
      %v668 = vld [vmem:[#allocation11 + $0x300] sm:$0xff]
      %v669 = vld [vmem:[#allocation11 + $0x308] sm:$0xff]
      %v670 = vld [vmem:[#allocation11 + $0x310] sm:$0xff]
      %v671 = vld [vmem:[#allocation11 + $0x318] sm:$0xff]
      %v672 = vld [vmem:[#allocation11 + $0x320] sm:$0xff]
      %v673 = vld [vmem:[#allocation11 + $0x328] sm:$0xff]
      %v674 = vld [vmem:[#allocation11 + $0x330] sm:$0xff]
      %v675 = vld [vmem:[#allocation11 + $0x338] sm:$0xff]
      %v676 = vld [vmem:[#allocation11 + $0x340] sm:$0xff]
      %v677 = vld [vmem:[#allocation11 + $0x348] sm:$0xff]
      %v678 = vld [vmem:[#allocation11 + $0x350] sm:$0xff]
      %v679 = vld [vmem:[#allocation11 + $0x358] sm:$0xff]
      %v680 = vld [vmem:[#allocation11 + $0x360] sm:$0xff]
      %v681 = vld [vmem:[#allocation11 + $0x368] sm:$0xff]
      %v682 = vld [vmem:[#allocation11 + $0x370] sm:$0xff]
      %v683 = vld [vmem:[#allocation11 + $0x378] sm:$0xff]
      %v684 = vld [vmem:[#allocation11 + $0x380] sm:$0xff]
      %v685 = vld [vmem:[#allocation11 + $0x388] sm:$0xff]
      %v686 = vld [vmem:[#allocation11 + $0x390] sm:$0xff]
      %v687 = vld [vmem:[#allocation11 + $0x398] sm:$0xff]
      %v688 = vld [vmem:[#allocation11 + $0x3a0] sm:$0xff]
      %v689 = vld [vmem:[#allocation11 + $0x3a8] sm:$0xff]
      %v690 = vld [vmem:[#allocation11 + $0x3b0] sm:$0xff]
      %v691 = vld [vmem:[#allocation11 + $0x3b8] sm:$0xff]
      %v692 = vld [vmem:[#allocation11 + $0x3c0] sm:$0xff]
      %v693 = vld [vmem:[#allocation11 + $0x3c8] sm:$0xff]
      %v694 = vld [vmem:[#allocation11 + $0x3d0] sm:$0xff]
      %v695 = vld [vmem:[#allocation11 + $0x3d8] sm:$0xff]
      %v696 = vld [vmem:[#allocation11 + $0x3e0] sm:$0xff]
      %v697 = vld [vmem:[#allocation11 + $0x3e8] sm:$0xff]
      %v698 = vld [vmem:[#allocation11 + $0x3f0] sm:$0xff]
      %v699 = vld [vmem:[#allocation11 + $0x3f8] sm:$0xff]
      %v700 = vld [vmem:[#allocation11 + $0x400] sm:$0xff]
      %v701 = vld [vmem:[#allocation11 + $0x408] sm:$0xff]
      %v702 = vld [vmem:[#allocation11 + $0x410] sm:$0xff]
      %v703 = vld [vmem:[#allocation11 + $0x418] sm:$0xff]
      %v704 = vld [vmem:[#allocation11 + $0x420] sm:$0xff]
      %v705 = vld [vmem:[#allocation11 + $0x428] sm:$0xff]
      %v706 = vld [vmem:[#allocation11 + $0x430] sm:$0xff]
      %v707 = vld [vmem:[#allocation11 + $0x438] sm:$0xff]
      %v708 = vld [vmem:[#allocation11 + $0x440] sm:$0xff]
      %v709 = vld [vmem:[#allocation11 + $0x448] sm:$0xff]
      %v710 = vld [vmem:[#allocation11 + $0x450] sm:$0xff]
      %v711 = vld [vmem:[#allocation11 + $0x458] sm:$0xff]
      %v712 = vld [vmem:[#allocation11 + $0x460] sm:$0xff]
      %v713 = vld [vmem:[#allocation11 + $0x468] sm:$0xff]
      %v714 = vld [vmem:[#allocation11 + $0x470] sm:$0xff]
      %v715 = vld [vmem:[#allocation11 + $0x478] sm:$0xff]
      %v716 = vld [vmem:[#allocation11 + $0x480] sm:$0xff]
      %v717 = vld [vmem:[#allocation11 + $0x488] sm:$0xff]
      %v718 = vld [vmem:[#allocation11 + $0x490] sm:$0xff]
      %v719 = vld [vmem:[#allocation11 + $0x498] sm:$0xff]
      %v720 = vld [vmem:[#allocation11 + $0x4a0] sm:$0xff]
      %v721 = vld [vmem:[#allocation11 + $0x4a8] sm:$0xff]
      %v722 = vld [vmem:[#allocation11 + $0x4b0] sm:$0xff]
      %v723 = vld [vmem:[#allocation11 + $0x4b8] sm:$0xff]
      %v724 = vld [vmem:[#allocation11 + $0x4c0] sm:$0xff]
      %v725 = vld [vmem:[#allocation11 + $0x4c8] sm:$0xff]
      %v726 = vld [vmem:[#allocation11 + $0x4d0] sm:$0xff]
      %v727 = vld [vmem:[#allocation11 + $0x4d8] sm:$0xff]
      %v728 = vld [vmem:[#allocation11 + $0x4e0] sm:$0xff]
      %v729 = vld [vmem:[#allocation11 + $0x4e8] sm:$0xff]
      %v730 = vld [vmem:[#allocation11 + $0x4f0] sm:$0xff]
      %v731 = vld [vmem:[#allocation11 + $0x4f8] sm:$0xff]
      %v732 = vld [vmem:[#allocation11 + $0x500] sm:$0xff]
      %v733 = vld [vmem:[#allocation11 + $0x508] sm:$0xff]
      %v734 = vld [vmem:[#allocation11 + $0x510] sm:$0xff]
      %v735 = vld [vmem:[#allocation11 + $0x518] sm:$0xff]
      %v736 = vld [vmem:[#allocation11 + $0x520] sm:$0xff]
      %v737 = vld [vmem:[#allocation11 + $0x528] sm:$0xff]
      %v738 = vld [vmem:[#allocation11 + $0x530] sm:$0xff]
      %v739 = vld [vmem:[#allocation11 + $0x538] sm:$0xff]
      %v740 = vld [vmem:[#allocation11 + $0x540] sm:$0xff]
      %v741 = vld [vmem:[#allocation11 + $0x548] sm:$0xff]
      %v742 = vld [vmem:[#allocation11 + $0x550] sm:$0xff]
      %v743 = vld [vmem:[#allocation11 + $0x558] sm:$0xff]
      %v744 = vld [vmem:[#allocation11 + $0x560] sm:$0xff]
      %v745 = vld [vmem:[#allocation11 + $0x568] sm:$0xff]
      %v746 = vld [vmem:[#allocation11 + $0x570] sm:$0xff]
      %v747 = vld [vmem:[#allocation11 + $0x578] sm:$0xff]
      %v748 = vld [vmem:[#allocation11 + $0x580] sm:$0xff]
      %v749 = vld [vmem:[#allocation11 + $0x588] sm:$0xff]
      %v750 = vld [vmem:[#allocation11 + $0x590] sm:$0xff]
      %v751 = vld [vmem:[#allocation11 + $0x598] sm:$0xff]
      %v752 = vld [vmem:[#allocation11 + $0x5a0] sm:$0xff]
      %v753 = vld [vmem:[#allocation11 + $0x5a8] sm:$0xff]
      %v754 = vld [vmem:[#allocation11 + $0x5b0] sm:$0xff]
      %v755 = vld [vmem:[#allocation11 + $0x5b8] sm:$0xff]
      %v756 = vld [vmem:[#allocation11 + $0x5c0] sm:$0xff]
      %v757 = vld [vmem:[#allocation11 + $0x5c8] sm:$0xff]
      %v758 = vld [vmem:[#allocation11 + $0x5d0] sm:$0xff]
      %v759 = vld [vmem:[#allocation11 + $0x5d8] sm:$0xff]
      %v760 = vld [vmem:[#allocation11 + $0x5e0] sm:$0xff]
      %v761 = vld [vmem:[#allocation11 + $0x5e8] sm:$0xff]
      %v762 = vld [vmem:[#allocation11 + $0x5f0] sm:$0xff]
      %v763 = vld [vmem:[#allocation11 + $0x5f8] sm:$0xff]
      %v764 = vld [vmem:[#allocation11 + $0x600] sm:$0xff]
      %v765 = vld [vmem:[#allocation11 + $0x608] sm:$0xff]
      %v766 = vld [vmem:[#allocation11 + $0x610] sm:$0xff]
      %v767 = vld [vmem:[#allocation11 + $0x618] sm:$0xff]
      %v768 = vld [vmem:[#allocation11 + $0x620] sm:$0xff]
      %v769 = vld [vmem:[#allocation11 + $0x628] sm:$0xff]
      %v770 = vld [vmem:[#allocation11 + $0x630] sm:$0xff]
      %v771 = vld [vmem:[#allocation11 + $0x638] sm:$0xff]
      %v772 = vld [vmem:[#allocation11 + $0x640] sm:$0xff]
      %v773 = vld [vmem:[#allocation11 + $0x648] sm:$0xff]
      %v774 = vld [vmem:[#allocation11 + $0x650] sm:$0xff]
      %v775 = vld [vmem:[#allocation11 + $0x658] sm:$0xff]
      %v776 = vld [vmem:[#allocation11 + $0x660] sm:$0xff]
      %v777 = vld [vmem:[#allocation11 + $0x668] sm:$0xff]
      %v778 = vld [vmem:[#allocation11 + $0x670] sm:$0xff]
      %v779 = vld [vmem:[#allocation11 + $0x678] sm:$0xff]
      %v780 = vld [vmem:[#allocation11 + $0x680] sm:$0xff]
      %v781 = vld [vmem:[#allocation11 + $0x688] sm:$0xff]
      %v782 = vld [vmem:[#allocation11 + $0x690] sm:$0xff]
      %v783 = vld [vmem:[#allocation11 + $0x698] sm:$0xff]
      %v784 = vld [vmem:[#allocation11 + $0x6a0] sm:$0xff]
      %v785 = vld [vmem:[#allocation11 + $0x6a8] sm:$0xff]
      %v786 = vld [vmem:[#allocation11 + $0x6b0] sm:$0xff]
      %v787 = vld [vmem:[#allocation11 + $0x6b8] sm:$0xff]
      %v788 = vld [vmem:[#allocation11 + $0x6c0] sm:$0xff]
      %v789 = vld [vmem:[#allocation11 + $0x6c8] sm:$0xff]
      %v790 = vld [vmem:[#allocation11 + $0x6d0] sm:$0xff]
      %v791 = vld [vmem:[#allocation11 + $0x6d8] sm:$0xff]
      %v792 = vld [vmem:[#allocation11 + $0x6e0] sm:$0xff]
      %v793 = vld [vmem:[#allocation11 + $0x6e8] sm:$0xff]
      %v794 = vld [vmem:[#allocation11 + $0x6f0] sm:$0xff]
      %v795 = vld [vmem:[#allocation11 + $0x6f8] sm:$0xff]
      %v796 = vld [vmem:[#allocation11 + $0x700] sm:$0xff]
      %v797 = vld [vmem:[#allocation11 + $0x708] sm:$0xff]
      %v798 = vld [vmem:[#allocation11 + $0x710] sm:$0xff]
      %v799 = vld [vmem:[#allocation11 + $0x718] sm:$0xff]
      %v800 = vld [vmem:[#allocation11 + $0x720] sm:$0xff]
      %v801 = vld [vmem:[#allocation11 + $0x728] sm:$0xff]
      %v802 = vld [vmem:[#allocation11 + $0x730] sm:$0xff]
      %v803 = vld [vmem:[#allocation11 + $0x738] sm:$0xff]
      %v804 = vld [vmem:[#allocation11 + $0x740] sm:$0xff]
      %v805 = vld [vmem:[#allocation11 + $0x748] sm:$0xff]
      %v806 = vld [vmem:[#allocation11 + $0x750] sm:$0xff]
      %v807 = vld [vmem:[#allocation11 + $0x758] sm:$0xff]
      %v808 = vld [vmem:[#allocation11 + $0x760] sm:$0xff]
      %v809 = vld [vmem:[#allocation11 + $0x768] sm:$0xff]
      %v810 = vld [vmem:[#allocation11 + $0x770] sm:$0xff]
      %v811 = vld [vmem:[#allocation11 + $0x778] sm:$0xff]
      %v812 = vld [vmem:[#allocation11 + $0x780] sm:$0xff]
      %v813 = vld [vmem:[#allocation11 + $0x788] sm:$0xff]
      %v814 = vld [vmem:[#allocation11 + $0x790] sm:$0xff]
      %v815 = vld [vmem:[#allocation11 + $0x798] sm:$0xff]
      %v816 = vld [vmem:[#allocation11 + $0x7a0] sm:$0xff]
      %v817 = vld [vmem:[#allocation11 + $0x7a8] sm:$0xff]
      %v818 = vld [vmem:[#allocation11 + $0x7b0] sm:$0xff]
      %v819 = vld [vmem:[#allocation11 + $0x7b8] sm:$0xff]
      %v820 = vld [vmem:[#allocation11 + $0x7c0] sm:$0xff]
      %v821 = vld [vmem:[#allocation11 + $0x7c8] sm:$0xff]
      %v822 = vld [vmem:[#allocation11 + $0x7d0] sm:$0xff]
      %v823 = vld [vmem:[#allocation11 + $0x7d8] sm:$0xff]
      %v824 = vld [vmem:[#allocation11 + $0x7e0] sm:$0xff]
      %v825 = vld [vmem:[#allocation11 + $0x7e8] sm:$0xff]
      %v826 = vld [vmem:[#allocation11 + $0x7f0] sm:$0xff]
      %v827 = vld [vmem:[#allocation11 + $0x7f8] sm:$0xff]
      %v828 = vld [vmem:[#allocation11 + $0x800] sm:$0xff]
      %v829 = vld [vmem:[#allocation11 + $0x808] sm:$0xff]
      %v830 = vld [vmem:[#allocation11 + $0x810] sm:$0xff]
      %v831 = vld [vmem:[#allocation11 + $0x818] sm:$0xff]
      %v832 = vld [vmem:[#allocation11 + $0x820] sm:$0xff]
      %v833 = vld [vmem:[#allocation11 + $0x828] sm:$0xff]
      %v834 = vld [vmem:[#allocation11 + $0x830] sm:$0xff]
      %v835 = vld [vmem:[#allocation11 + $0x838] sm:$0xff]
      %v836 = vld [vmem:[#allocation11 + $0x840] sm:$0xff]
      %v837 = vld [vmem:[#allocation11 + $0x848] sm:$0xff]
      %v838 = vld [vmem:[#allocation11 + $0x850] sm:$0xff]
      %v839 = vld [vmem:[#allocation11 + $0x858] sm:$0xff]
      %v840 = vld [vmem:[#allocation11 + $0x860] sm:$0xff]
      %v841 = vld [vmem:[#allocation11 + $0x868] sm:$0xff]
      %v842 = vld [vmem:[#allocation11 + $0x870] sm:$0xff]
      %v843 = vld [vmem:[#allocation11 + $0x878] sm:$0xff]
      %v844 = vld [vmem:[#allocation11 + $0x880] sm:$0xff]
      %v845 = vld [vmem:[#allocation11 + $0x888] sm:$0xff]
      %v846 = vld [vmem:[#allocation11 + $0x890] sm:$0xff]
      %v847 = vld [vmem:[#allocation11 + $0x898] sm:$0xff]
      %v848 = vld [vmem:[#allocation11 + $0x8a0] sm:$0xff]
      %v849 = vld [vmem:[#allocation11 + $0x8a8] sm:$0xff]
      %v850 = vld [vmem:[#allocation11 + $0x8b0] sm:$0xff]
      %v851 = vld [vmem:[#allocation11 + $0x8b8] sm:$0xff]
      %v852 = vld [vmem:[#allocation11 + $0x8c0] sm:$0xff]
      %v853 = vld [vmem:[#allocation11 + $0x8c8] sm:$0xff]
      %v854 = vld [vmem:[#allocation11 + $0x8d0] sm:$0xff]
      %v855 = vld [vmem:[#allocation11 + $0x8d8] sm:$0xff]
      %v856 = vld [vmem:[#allocation11 + $0x8e0] sm:$0xff]
      %v857 = vld [vmem:[#allocation11 + $0x8e8] sm:$0xff]
      %v858 = vld [vmem:[#allocation11 + $0x8f0] sm:$0xff]
      %v859 = vld [vmem:[#allocation11 + $0x8f8] sm:$0xff]
      %v860 = vld [vmem:[#allocation11 + $0x900] sm:$0xff]
      %v861 = vld [vmem:[#allocation11 + $0x908] sm:$0xff]
      %v862 = vld [vmem:[#allocation11 + $0x910] sm:$0xff]
      %v863 = vld [vmem:[#allocation11 + $0x918] sm:$0xff]
      %v864 = vld [vmem:[#allocation11 + $0x920] sm:$0xff]
      %v865 = vld [vmem:[#allocation11 + $0x928] sm:$0xff]
      %v866 = vld [vmem:[#allocation11 + $0x930] sm:$0xff]
      %v867 = vld [vmem:[#allocation11 + $0x938] sm:$0xff]
      %v868 = vld [vmem:[#allocation11 + $0x940] sm:$0xff]
      %v869 = vld [vmem:[#allocation11 + $0x948] sm:$0xff]
      %v870 = vld [vmem:[#allocation11 + $0x950] sm:$0xff]
      %v871 = vld [vmem:[#allocation11 + $0x958] sm:$0xff]
      %v872 = vld [vmem:[#allocation11 + $0x960] sm:$0xff]
      %v873 = vld [vmem:[#allocation11 + $0x968] sm:$0xff]
      %v874 = vld [vmem:[#allocation11 + $0x970] sm:$0xff]
      %v875 = vld [vmem:[#allocation11 + $0x978] sm:$0xff]
      %v876 = vld [vmem:[#allocation11 + $0x980] sm:$0xff]
      %v877 = vld [vmem:[#allocation11 + $0x988] sm:$0xff]
      %v878 = vld [vmem:[#allocation11 + $0x990] sm:$0xff]
      %v879 = vld [vmem:[#allocation11 + $0x998] sm:$0xff]
      %v880 = vld [vmem:[#allocation11 + $0x9a0] sm:$0xff]
      %v881 = vld [vmem:[#allocation11 + $0x9a8] sm:$0xff]
      %v882 = vld [vmem:[#allocation11 + $0x9b0] sm:$0xff]
      %v883 = vld [vmem:[#allocation11 + $0x9b8] sm:$0xff]
      %v884 = vld [vmem:[#allocation11 + $0x9c0] sm:$0xff]
      %v885 = vld [vmem:[#allocation11 + $0x9c8] sm:$0xff]
      %v886 = vld [vmem:[#allocation11 + $0x9d0] sm:$0xff]
      %v887 = vld [vmem:[#allocation11 + $0x9d8] sm:$0xff]
      %v888 = vld [vmem:[#allocation11 + $0x9e0] sm:$0xff]
      %v889 = vld [vmem:[#allocation11 + $0x9e8] sm:$0xff]
      %v890 = vld [vmem:[#allocation11 + $0x9f0] sm:$0xff]
      %v891 = vld [vmem:[#allocation11 + $0x9f8] sm:$0xff]
      %v892 = vld [vmem:[#allocation11 + $0xa00] sm:$0xff]
      %v893 = vld [vmem:[#allocation11 + $0xa08] sm:$0xff]
      %v894 = vld [vmem:[#allocation11 + $0xa10] sm:$0xff]
      %v895 = vld [vmem:[#allocation11 + $0xa18] sm:$0xff]
      %v896 = vld [vmem:[#allocation11 + $0xa20] sm:$0xff]
      %v897 = vld [vmem:[#allocation11 + $0xa28] sm:$0xff]
      %v898 = vld [vmem:[#allocation11 + $0xa30] sm:$0xff]
      %v899 = vld [vmem:[#allocation11 + $0xa38] sm:$0xff]
      %v900 = vld [vmem:[#allocation11 + $0xa40] sm:$0xff]
      %v901 = vld [vmem:[#allocation11 + $0xa48] sm:$0xff]
      %v902 = vld [vmem:[#allocation11 + $0xa50] sm:$0xff]
      %v903 = vld [vmem:[#allocation11 + $0xa58] sm:$0xff]
      %v904 = vld [vmem:[#allocation11 + $0xa60] sm:$0xff]
      %v905 = vld [vmem:[#allocation11 + $0xa68] sm:$0xff]
      %v906 = vld [vmem:[#allocation11 + $0xa70] sm:$0xff]
      %v907 = vld [vmem:[#allocation11 + $0xa78] sm:$0xff]
      %v908 = vld [vmem:[#allocation11 + $0xa80] sm:$0xff]
      %v909 = vld [vmem:[#allocation11 + $0xa88] sm:$0xff]
      %v910 = vld [vmem:[#allocation11 + $0xa90] sm:$0xff]
      %v911 = vld [vmem:[#allocation11 + $0xa98] sm:$0xff]
      %v912 = vld [vmem:[#allocation11 + $0xaa0] sm:$0xff]
      %v913 = vld [vmem:[#allocation11 + $0xaa8] sm:$0xff]
      %v914 = vld [vmem:[#allocation11 + $0xab0] sm:$0xff]
      %v915 = vld [vmem:[#allocation11 + $0xab8] sm:$0xff]
      %v916 = vld [vmem:[#allocation11 + $0xac0] sm:$0xff]
      %v917 = vld [vmem:[#allocation11 + $0xac8] sm:$0xff]
      %v918 = vld [vmem:[#allocation11 + $0xad0] sm:$0xff]
      %v919 = vld [vmem:[#allocation11 + $0xad8] sm:$0xff]
      %v920 = vld [vmem:[#allocation11 + $0xae0] sm:$0xff]
      %v921 = vld [vmem:[#allocation11 + $0xae8] sm:$0xff]
      %v922 = vld [vmem:[#allocation11 + $0xaf0] sm:$0xff]
      %v923 = vld [vmem:[#allocation11 + $0xaf8] sm:$0xff]
      %v924 = vld [vmem:[#allocation11 + $0xb00] sm:$0xff]
      %v925 = vld [vmem:[#allocation11 + $0xb08] sm:$0xff]
      %v926 = vld [vmem:[#allocation11 + $0xb10] sm:$0xff]
      %v927 = vld [vmem:[#allocation11 + $0xb18] sm:$0xff]
      %v928 = vld [vmem:[#allocation11 + $0xb20] sm:$0xff]
      %v929 = vld [vmem:[#allocation11 + $0xb28] sm:$0xff]
      %v930 = vld [vmem:[#allocation11 + $0xb30] sm:$0xff]
      %v931 = vld [vmem:[#allocation11 + $0xb38] sm:$0xff]
      %v932 = vld [vmem:[#allocation11 + $0xb40] sm:$0xff]
      %v933 = vld [vmem:[#allocation11 + $0xb48] sm:$0xff]
      %v934 = vld [vmem:[#allocation11 + $0xb50] sm:$0xff]
      %v935 = vld [vmem:[#allocation11 + $0xb58] sm:$0xff]
      %v936 = vld [vmem:[#allocation11 + $0xb60] sm:$0xff]
      %v937 = vld [vmem:[#allocation11 + $0xb68] sm:$0xff]
      %v938 = vld [vmem:[#allocation11 + $0xb70] sm:$0xff]
      %v939 = vld [vmem:[#allocation11 + $0xb78] sm:$0xff]
      %v940 = vld [vmem:[#allocation11 + $0xb80] sm:$0xff]
      %v941 = vld [vmem:[#allocation11 + $0xb88] sm:$0xff]
      %v942 = vld [vmem:[#allocation11 + $0xb90] sm:$0xff]
      %v943 = vld [vmem:[#allocation11 + $0xb98] sm:$0xff]
      %v944 = vld [vmem:[#allocation11 + $0xba0] sm:$0xff]
      %v945 = vld [vmem:[#allocation11 + $0xba8] sm:$0xff]
      %v946 = vld [vmem:[#allocation11 + $0xbb0] sm:$0xff]
      %v947 = vld [vmem:[#allocation11 + $0xbb8] sm:$0xff]
      %v948 = vld [vmem:[#allocation11 + $0xbc0] sm:$0xff]
      %v949 = vld [vmem:[#allocation11 + $0xbc8] sm:$0xff]
      %v950 = vld [vmem:[#allocation11 + $0xbd0] sm:$0xff]
      %v951 = vld [vmem:[#allocation11 + $0xbd8] sm:$0xff]
      %v952 = vld [vmem:[#allocation11 + $0xbe0] sm:$0xff]
      %v953 = vld [vmem:[#allocation11 + $0xbe8] sm:$0xff]
      %v954 = vld [vmem:[#allocation11 + $0xbf0] sm:$0xff]
      %v955 = vld [vmem:[#allocation11 + $0xbf8] sm:$0xff]
      %956 = vmatprep.subr.mxu0 %v573
      %957 = vmatpush1.msra.mxu0 %v572
      %958 = vmatprep.subr.mxu0 %v579
      %959 = vmatpush1.msra.mxu0 %v578
      %960 = vmatprep.subr.mxu0 %v585
      %961 = vmatpush1.msra.mxu0 %v584
      %962 = vmatprep.subr.mxu0 %v591
      %963 = vmatpush1.msra.mxu0 %v590
      %964 = vmatprep.subr.mxu0 %v597
      %965 = vmatpush1.msra.mxu0 %v596
      %966 = vmatprep.subr.mxu0 %v603
      %967 = vmatpush1.msra.mxu0 %v602
      %968 = vmatprep.subr.mxu0 %v609
      %969 = vmatpush1.msra.mxu0 %v608
      %970 = vmatprep.subr.mxu0 %v615
      %971 = vmatpush1.msra.mxu0 %v614
      %972 = vmatprep.subr.mxu0 %v621
      %973 = vmatpush1.msra.mxu0 %v620
      %974 = vmatprep.subr.mxu0 %v627
      %975 = vmatpush1.msra.mxu0 %v626
      %976 = vmatprep.subr.mxu0 %v633
      %977 = vmatpush1.msra.mxu0 %v632
      %978 = vmatprep.subr.mxu0 %v639
      %979 = vmatpush1.msra.mxu0 %v638
      %980 = vmatprep.subr.mxu0 %v645
      %981 = vmatpush1.msra.mxu0 %v644
      %982 = vmatprep.subr.mxu0 %v651
      %983 = vmatpush1.msra.mxu0 %v650
      %984 = vmatprep.subr.mxu0 %v657
      %985 = vmatpush1.msra.mxu0 %v656
      %986 = vmatprep.subr.mxu0 %v663
      %987 = vmatpush1.msra.mxu0 %v662
      %988 = vmatprep.subr.mxu0 %v669
      %989 = vmatpush1.msra.mxu0 %v668
      %990 = vmatprep.subr.mxu0 %v675
      %991 = vmatpush1.msra.mxu0 %v674
      %992 = vmatprep.subr.mxu0 %v681
      %993 = vmatpush1.msra.mxu0 %v680
      %994 = vmatprep.subr.mxu0 %v687
      %995 = vmatpush1.msra.mxu0 %v686
      %996 = vmatprep.subr.mxu0 %v693
      %997 = vmatpush1.msra.mxu0 %v692
      %998 = vmatprep.subr.mxu0 %v699
      %999 = vmatpush1.msra.mxu0 %v698
      %1000 = vmatprep.subr.mxu0 %v705
      %1001 = vmatpush1.msra.mxu0 %v704
      %1002 = vmatprep.subr.mxu0 %v711
      %1003 = vmatpush1.msra.mxu0 %v710
      %1004 = vmatprep.subr.mxu0 %v717
      %1005 = vmatpush1.msra.mxu0 %v716
      %1006 = vmatprep.subr.mxu0 %v723
      %1007 = vmatpush1.msra.mxu0 %v722
      %1008 = vmatprep.subr.mxu0 %v729
      %1009 = vmatpush1.msra.mxu0 %v728
      %1010 = vmatprep.subr.mxu0 %v735
      %1011 = vmatpush1.msra.mxu0 %v734
      %1012 = vmatprep.subr.mxu0 %v741
      %1013 = vmatpush1.msra.mxu0 %v740
      %1014 = vmatprep.subr.mxu0 %v747
      %1015 = vmatpush1.msra.mxu0 %v746
      %1016 = vmatprep.subr.mxu0 %v753
      %1017 = vmatpush1.msra.mxu0 %v752
      %1018 = vmatprep.subr.mxu0 %v759
      %1019 = vmatpush1.msra.mxu0 %v758
      %1020 = vmatprep.mubr.f32.mxu0 %v569
      %1021 = vmatmul.mubr.f32.gmra.mrb[0].mxu0 %v568
      %v1022 = vpop.f32.mrb[0].mxu0
      %v1023 = vadd.f32 0.0, %v1022
      %v1024 = vpop.f32.mrb[0].mxu0
      %v1025 = vadd.f32 0.0, %v1024
      %1026 = vdwg.mxu0
      %1027 = vmatprep.subr.mxu0 %v765
      %1028 = vmatpush1.msra.mxu0 %v764
      %1029 = vmatprep.subr.mxu0 %v771
      %1030 = vmatpush1.msra.mxu0 %v770
      %1031 = vmatprep.subr.mxu0 %v777
      %1032 = vmatpush1.msra.mxu0 %v776
      %1033 = vmatprep.subr.mxu0 %v783
      %1034 = vmatpush1.msra.mxu0 %v782
      %1035 = vmatprep.subr.mxu0 %v789
      %1036 = vmatpush1.msra.mxu0 %v788
      %1037 = vmatprep.subr.mxu0 %v795
      %1038 = vmatpush1.msra.mxu0 %v794
      %1039 = vmatprep.subr.mxu0 %v801
      %1040 = vmatpush1.msra.mxu0 %v800
      %1041 = vmatprep.subr.mxu0 %v807
      %1042 = vmatpush1.msra.mxu0 %v806
      %1043 = vmatprep.subr.mxu0 %v813
      %1044 = vmatpush1.msra.mxu0 %v812
      %1045 = vmatprep.subr.mxu0 %v819
      %1046 = vmatpush1.msra.mxu0 %v818
      %1047 = vmatprep.subr.mxu0 %v825
      %1048 = vmatpush1.msra.mxu0 %v824
      %1049 = vmatprep.subr.mxu0 %v831
      %1050 = vmatpush1.msra.mxu0 %v830
      %1051 = vmatprep.subr.mxu0 %v837
      %1052 = vmatpush1.msra.mxu0 %v836
      %1053 = vmatprep.subr.mxu0 %v843
      %1054 = vmatpush1.msra.mxu0 %v842
      %1055 = vmatprep.subr.mxu0 %v849
      %1056 = vmatpush1.msra.mxu0 %v848
      %1057 = vmatprep.subr.mxu0 %v855
      %1058 = vmatpush1.msra.mxu0 %v854
      %1059 = vmatprep.subr.mxu0 %v861
      %1060 = vmatpush1.msra.mxu0 %v860
      %1061 = vmatprep.subr.mxu0 %v867
      %1062 = vmatpush1.msra.mxu0 %v866
      %1063 = vmatprep.subr.mxu0 %v873
      %1064 = vmatpush1.msra.mxu0 %v872
      %1065 = vmatprep.subr.mxu0 %v879
      %1066 = vmatpush1.msra.mxu0 %v878
      %1067 = vmatprep.subr.mxu0 %v885
      %1068 = vmatpush1.msra.mxu0 %v884
      %1069 = vmatprep.subr.mxu0 %v891
      %1070 = vmatpush1.msra.mxu0 %v890
      %1071 = vmatprep.subr.mxu0 %v897
      %1072 = vmatpush1.msra.mxu0 %v896
      %1073 = vmatprep.subr.mxu0 %v903
      %1074 = vmatpush1.msra.mxu0 %v902
      %1075 = vmatprep.subr.mxu0 %v909
      %1076 = vmatpush1.msra.mxu0 %v908
      %1077 = vmatprep.subr.mxu0 %v915
      %1078 = vmatpush1.msra.mxu0 %v914
      %1079 = vmatprep.subr.mxu0 %v921
      %1080 = vmatpush1.msra.mxu0 %v920
      %1081 = vmatprep.subr.mxu0 %v927
      %1082 = vmatpush1.msra.mxu0 %v926
      %1083 = vmatprep.subr.mxu0 %v933
      %1084 = vmatpush1.msra.mxu0 %v932
      %1085 = vmatprep.subr.mxu0 %v939
      %1086 = vmatpush1.msra.mxu0 %v938
      %1087 = vmatprep.subr.mxu0 %v945
      %1088 = vmatpush1.msra.mxu0 %v944
      %1089 = vmatprep.subr.mxu0 %v951
      %1090 = vmatpush1.msra.mxu0 %v950
      %1091 = vmatprep.mubr.f32.mxu0 %v571
      %1092 = vmatmul.mubr.f32.gmra.mrb[0].mxu0 %v570
      %v1093 = vpop.f32.mrb[0].mxu0
      %v1094 = vadd.f32 %v1023, %v1093
      %v1095 = vpop.f32.mrb[0].mxu0
      %v1096 = vadd.f32 %v1025, %v1095
      %1097 = vdwg.mxu0
      %1098 = vmatprep.subr.mxu0 %v575
      %1099 = vmatpush1.msra.mxu0 %v574
      %1100 = vmatprep.subr.mxu0 %v581
      %1101 = vmatpush1.msra.mxu0 %v580
      %1102 = vmatprep.subr.mxu0 %v587
      %1103 = vmatpush1.msra.mxu0 %v586
      %1104 = vmatprep.subr.mxu0 %v593
      %1105 = vmatpush1.msra.mxu0 %v592
      %1106 = vmatprep.subr.mxu0 %v599
      %1107 = vmatpush1.msra.mxu0 %v598
      %1108 = vmatprep.subr.mxu0 %v605
      %1109 = vmatpush1.msra.mxu0 %v604
      %1110 = vmatprep.subr.mxu0 %v611
      %1111 = vmatpush1.msra.mxu0 %v610
      %1112 = vmatprep.subr.mxu0 %v617
      %1113 = vmatpush1.msra.mxu0 %v616
      %1114 = vmatprep.subr.mxu0 %v623
      %1115 = vmatpush1.msra.mxu0 %v622
      %1116 = vmatprep.subr.mxu0 %v629
      %1117 = vmatpush1.msra.mxu0 %v628
      %1118 = vmatprep.subr.mxu0 %v635
      %1119 = vmatpush1.msra.mxu0 %v634
      %1120 = vmatprep.subr.mxu0 %v641
      %1121 = vmatpush1.msra.mxu0 %v640
      %1122 = vmatprep.subr.mxu0 %v647
      %1123 = vmatpush1.msra.mxu0 %v646
      %1124 = vmatprep.subr.mxu0 %v653
      %1125 = vmatpush1.msra.mxu0 %v652
      %1126 = vmatprep.subr.mxu0 %v659
      %1127 = vmatpush1.msra.mxu0 %v658
      %1128 = vmatprep.subr.mxu0 %v665
      %1129 = vmatpush1.msra.mxu0 %v664
      %1130 = vmatprep.subr.mxu0 %v671
      %1131 = vmatpush1.msra.mxu0 %v670
      %1132 = vmatprep.subr.mxu0 %v677
      %1133 = vmatpush1.msra.mxu0 %v676
      %1134 = vmatprep.subr.mxu0 %v683
      %1135 = vmatpush1.msra.mxu0 %v682
      %1136 = vmatprep.subr.mxu0 %v689
      %1137 = vmatpush1.msra.mxu0 %v688
      %1138 = vmatprep.subr.mxu0 %v695
      %1139 = vmatpush1.msra.mxu0 %v694
      %1140 = vmatprep.subr.mxu0 %v701
      %1141 = vmatpush1.msra.mxu0 %v700
      %1142 = vmatprep.subr.mxu0 %v707
      %1143 = vmatpush1.msra.mxu0 %v706
      %1144 = vmatprep.subr.mxu0 %v713
      %1145 = vmatpush1.msra.mxu0 %v712
      %1146 = vmatprep.subr.mxu0 %v719
      %1147 = vmatpush1.msra.mxu0 %v718
      %1148 = vmatprep.subr.mxu0 %v725
      %1149 = vmatpush1.msra.mxu0 %v724
      %1150 = vmatprep.subr.mxu0 %v731
      %1151 = vmatpush1.msra.mxu0 %v730
      %1152 = vmatprep.subr.mxu0 %v737
      %1153 = vmatpush1.msra.mxu0 %v736
      %1154 = vmatprep.subr.mxu0 %v743
      %1155 = vmatpush1.msra.mxu0 %v742
      %1156 = vmatprep.subr.mxu0 %v749
      %1157 = vmatpush1.msra.mxu0 %v748
      %1158 = vmatprep.subr.mxu0 %v755
      %1159 = vmatpush1.msra.mxu0 %v754
      %1160 = vmatprep.subr.mxu0 %v761
      %1161 = vmatpush1.msra.mxu0 %v760
      %1162 = vmatprep.mubr.f32.mxu0 %v569
      %1163 = vmatmul.mubr.f32.gmra.mrb[0].mxu0 %v568
      %v1164 = vpop.f32.mrb[0].mxu0
      %v1165 = vadd.f32 0.0, %v1164
      %v1166 = vpop.f32.mrb[0].mxu0
      %v1167 = vadd.f32 0.0, %v1166
      %1168 = vdwg.mxu0
      %1169 = vmatprep.subr.mxu0 %v767
      %1170 = vmatpush1.msra.mxu0 %v766
      %1171 = vmatprep.subr.mxu0 %v773
      %1172 = vmatpush1.msra.mxu0 %v772
      %1173 = vmatprep.subr.mxu0 %v779
      %1174 = vmatpush1.msra.mxu0 %v778
      %1175 = vmatprep.subr.mxu0 %v785
      %1176 = vmatpush1.msra.mxu0 %v784
      %1177 = vmatprep.subr.mxu0 %v791
      %1178 = vmatpush1.msra.mxu0 %v790
      %1179 = vmatprep.subr.mxu0 %v797
      %1180 = vmatpush1.msra.mxu0 %v796
      %1181 = vmatprep.subr.mxu0 %v803
      %1182 = vmatpush1.msra.mxu0 %v802
      %1183 = vmatprep.subr.mxu0 %v809
      %1184 = vmatpush1.msra.mxu0 %v808
      %1185 = vmatprep.subr.mxu0 %v815
      %1186 = vmatpush1.msra.mxu0 %v814
      %1187 = vmatprep.subr.mxu0 %v821
      %1188 = vmatpush1.msra.mxu0 %v820
      %1189 = vmatprep.subr.mxu0 %v827
      %1190 = vmatpush1.msra.mxu0 %v826
      %1191 = vmatprep.subr.mxu0 %v833
      %1192 = vmatpush1.msra.mxu0 %v832
      %1193 = vmatprep.subr.mxu0 %v839
      %1194 = vmatpush1.msra.mxu0 %v838
      %1195 = vmatprep.subr.mxu0 %v845
      %1196 = vmatpush1.msra.mxu0 %v844
      %1197 = vmatprep.subr.mxu0 %v851
      %1198 = vmatpush1.msra.mxu0 %v850
      %1199 = vmatprep.subr.mxu0 %v857
      %1200 = vmatpush1.msra.mxu0 %v856
      %1201 = vmatprep.subr.mxu0 %v863
      %1202 = vmatpush1.msra.mxu0 %v862
      %1203 = vmatprep.subr.mxu0 %v869
      %1204 = vmatpush1.msra.mxu0 %v868
      %1205 = vmatprep.subr.mxu0 %v875
      %1206 = vmatpush1.msra.mxu0 %v874
      %1207 = vmatprep.subr.mxu0 %v881
      %1208 = vmatpush1.msra.mxu0 %v880
      %1209 = vmatprep.subr.mxu0 %v887
      %1210 = vmatpush1.msra.mxu0 %v886
      %1211 = vmatprep.subr.mxu0 %v893
      %1212 = vmatpush1.msra.mxu0 %v892
      %1213 = vmatprep.subr.mxu0 %v899
      %1214 = vmatpush1.msra.mxu0 %v898
      %1215 = vmatprep.subr.mxu0 %v905
      %1216 = vmatpush1.msra.mxu0 %v904
      %1217 = vmatprep.subr.mxu0 %v911
      %1218 = vmatpush1.msra.mxu0 %v910
      %1219 = vmatprep.subr.mxu0 %v917
      %1220 = vmatpush1.msra.mxu0 %v916
      %1221 = vmatprep.subr.mxu0 %v923
      %1222 = vmatpush1.msra.mxu0 %v922
      %1223 = vmatprep.subr.mxu0 %v929
      %1224 = vmatpush1.msra.mxu0 %v928
      %1225 = vmatprep.subr.mxu0 %v935
      %1226 = vmatpush1.msra.mxu0 %v934
      %1227 = vmatprep.subr.mxu0 %v941
      %1228 = vmatpush1.msra.mxu0 %v940
      %1229 = vmatprep.subr.mxu0 %v947
      %1230 = vmatpush1.msra.mxu0 %v946
      %1231 = vmatprep.subr.mxu0 %v953
      %1232 = vmatpush1.msra.mxu0 %v952
      %1233 = vmatprep.mubr.f32.mxu0 %v571
      %1234 = vmatmul.mubr.f32.gmra.mrb[0].mxu0 %v570
      %v1235 = vpop.f32.mrb[0].mxu0
      %v1236 = vadd.f32 %v1165, %v1235
      %v1237 = vpop.f32.mrb[0].mxu0
      %v1238 = vadd.f32 %v1167, %v1237
      %1239 = vdwg.mxu0
      %1240 = vmatprep.subr.mxu0 %v577
      %1241 = vmatpush1.msra.mxu0 %v576
      %1242 = vmatprep.subr.mxu0 %v583
      %1243 = vmatpush1.msra.mxu0 %v582
      %1244 = vmatprep.subr.mxu0 %v589
      %1245 = vmatpush1.msra.mxu0 %v588
      %1246 = vmatprep.subr.mxu0 %v595
      %1247 = vmatpush1.msra.mxu0 %v594
      %1248 = vmatprep.subr.mxu0 %v601
      %1249 = vmatpush1.msra.mxu0 %v600
      %1250 = vmatprep.subr.mxu0 %v607
      %1251 = vmatpush1.msra.mxu0 %v606
      %1252 = vmatprep.subr.mxu0 %v613
      %1253 = vmatpush1.msra.mxu0 %v612
      %1254 = vmatprep.subr.mxu0 %v619
      %1255 = vmatpush1.msra.mxu0 %v618
      %1256 = vmatprep.subr.mxu0 %v625
      %1257 = vmatpush1.msra.mxu0 %v624
      %1258 = vmatprep.subr.mxu0 %v631
      %1259 = vmatpush1.msra.mxu0 %v630
      %1260 = vmatprep.subr.mxu0 %v637
      %1261 = vmatpush1.msra.mxu0 %v636
      %1262 = vmatprep.subr.mxu0 %v643
      %1263 = vmatpush1.msra.mxu0 %v642
      %1264 = vmatprep.subr.mxu0 %v649
      %1265 = vmatpush1.msra.mxu0 %v648
      %1266 = vmatprep.subr.mxu0 %v655
      %1267 = vmatpush1.msra.mxu0 %v654
      %1268 = vmatprep.subr.mxu0 %v661
      %1269 = vmatpush1.msra.mxu0 %v660
      %1270 = vmatprep.subr.mxu0 %v667
      %1271 = vmatpush1.msra.mxu0 %v666
      %1272 = vmatprep.subr.mxu0 %v673
      %1273 = vmatpush1.msra.mxu0 %v672
      %1274 = vmatprep.subr.mxu0 %v679
      %1275 = vmatpush1.msra.mxu0 %v678
      %1276 = vmatprep.subr.mxu0 %v685
      %1277 = vmatpush1.msra.mxu0 %v684
      %1278 = vmatprep.subr.mxu0 %v691
      %1279 = vmatpush1.msra.mxu0 %v690
      %1280 = vmatprep.subr.mxu0 %v697
      %1281 = vmatpush1.msra.mxu0 %v696
      %1282 = vmatprep.subr.mxu0 %v703
      %1283 = vmatpush1.msra.mxu0 %v702
      %1284 = vmatprep.subr.mxu0 %v709
      %1285 = vmatpush1.msra.mxu0 %v708
      %1286 = vmatprep.subr.mxu0 %v715
      %1287 = vmatpush1.msra.mxu0 %v714
      %1288 = vmatprep.subr.mxu0 %v721
      %1289 = vmatpush1.msra.mxu0 %v720
      %1290 = vmatprep.subr.mxu0 %v727
      %1291 = vmatpush1.msra.mxu0 %v726
      %1292 = vmatprep.subr.mxu0 %v733
      %1293 = vmatpush1.msra.mxu0 %v732
      %1294 = vmatprep.subr.mxu0 %v739
      %1295 = vmatpush1.msra.mxu0 %v738
      %1296 = vmatprep.subr.mxu0 %v745
      %1297 = vmatpush1.msra.mxu0 %v744
      %1298 = vmatprep.subr.mxu0 %v751
      %1299 = vmatpush1.msra.mxu0 %v750
      %1300 = vmatprep.subr.mxu0 %v757
      %1301 = vmatpush1.msra.mxu0 %v756
      %1302 = vmatprep.subr.mxu0 %v763
      %1303 = vmatpush1.msra.mxu0 %v762
      %1304 = vmatprep.mubr.f32.mxu0 %v569
      %1305 = vmatmul.mubr.f32.gmra.mrb[0].mxu0 %v568
      %v1306 = vpop.f32.mrb[0].mxu0
      %v1307 = vadd.f32 0.0, %v1306
      %v1308 = vpop.f32.mrb[0].mxu0
      %v1309 = vadd.f32 0.0, %v1308
      %1310 = vdwg.mxu0
      %1311 = vmatprep.subr.mxu0 %v769
      %1312 = vmatpush1.msra.mxu0 %v768
      %1313 = vmatprep.subr.mxu0 %v775
      %1314 = vmatpush1.msra.mxu0 %v774
      %1315 = vmatprep.subr.mxu0 %v781
      %1316 = vmatpush1.msra.mxu0 %v780
      %1317 = vmatprep.subr.mxu0 %v787
      %1318 = vmatpush1.msra.mxu0 %v786
      %1319 = vmatprep.subr.mxu0 %v793
      %1320 = vmatpush1.msra.mxu0 %v792
      %1321 = vmatprep.subr.mxu0 %v799
      %1322 = vmatpush1.msra.mxu0 %v798
      %1323 = vmatprep.subr.mxu0 %v805
      %1324 = vmatpush1.msra.mxu0 %v804
      %1325 = vmatprep.subr.mxu0 %v811
      %1326 = vmatpush1.msra.mxu0 %v810
      %1327 = vmatprep.subr.mxu0 %v817
      %1328 = vmatpush1.msra.mxu0 %v816
      %1329 = vmatprep.subr.mxu0 %v823
      %1330 = vmatpush1.msra.mxu0 %v822
      %1331 = vmatprep.subr.mxu0 %v829
      %1332 = vmatpush1.msra.mxu0 %v828
      %1333 = vmatprep.subr.mxu0 %v835
      %1334 = vmatpush1.msra.mxu0 %v834
      %1335 = vmatprep.subr.mxu0 %v841
      %1336 = vmatpush1.msra.mxu0 %v840
      %1337 = vmatprep.subr.mxu0 %v847
      %1338 = vmatpush1.msra.mxu0 %v846
      %1339 = vmatprep.subr.mxu0 %v853
      %1340 = vmatpush1.msra.mxu0 %v852
      %1341 = vmatprep.subr.mxu0 %v859
      %1342 = vmatpush1.msra.mxu0 %v858
      %1343 = vmatprep.subr.mxu0 %v865
      %1344 = vmatpush1.msra.mxu0 %v864
      %1345 = vmatprep.subr.mxu0 %v871
      %1346 = vmatpush1.msra.mxu0 %v870
      %1347 = vmatprep.subr.mxu0 %v877
      %1348 = vmatpush1.msra.mxu0 %v876
      %1349 = vmatprep.subr.mxu0 %v883
      %1350 = vmatpush1.msra.mxu0 %v882
      %1351 = vmatprep.subr.mxu0 %v889
      %1352 = vmatpush1.msra.mxu0 %v888
      %1353 = vmatprep.subr.mxu0 %v895
      %1354 = vmatpush1.msra.mxu0 %v894
      %1355 = vmatprep.subr.mxu0 %v901
      %1356 = vmatpush1.msra.mxu0 %v900
      %1357 = vmatprep.subr.mxu0 %v907
      %1358 = vmatpush1.msra.mxu0 %v906
      %1359 = vmatprep.subr.mxu0 %v913
      %1360 = vmatpush1.msra.mxu0 %v912
      %1361 = vmatprep.subr.mxu0 %v919
      %1362 = vmatpush1.msra.mxu0 %v918
      %1363 = vmatprep.subr.mxu0 %v925
      %1364 = vmatpush1.msra.mxu0 %v924
      %1365 = vmatprep.subr.mxu0 %v931
      %1366 = vmatpush1.msra.mxu0 %v930
      %1367 = vmatprep.subr.mxu0 %v937
      %1368 = vmatpush1.msra.mxu0 %v936
      %1369 = vmatprep.subr.mxu0 %v943
      %1370 = vmatpush1.msra.mxu0 %v942
      %1371 = vmatprep.subr.mxu0 %v949
      %1372 = vmatpush1.msra.mxu0 %v948
      %1373 = vmatprep.subr.mxu0 %v955
      %1374 = vmatpush1.msra.mxu0 %v954
      %1375 = vmatprep.mubr.f32.mxu0 %v571
      %1376 = vmatmul.mubr.f32.gmra.mrb[0].mxu0 %v570
      %v1377 = vpop.f32.mrb[0].mxu0
      %v1378 = vadd.f32 %v1307, %v1377
      %v1379 = vpop.f32.mrb[0].mxu0
      %v1380 = vadd.f32 %v1309, %v1379
      %1381 = vdwg.mxu0
      %vm1382 = vcmask 1041408
      %v1383 = vsel %vm1382, %v1094, 0.0
      %v1384 = vrot.slane %v1383, 4
      %v1385 = vadd.f32 %v1383, %v1384
      %v1386 = vrot.slane %v1385, 2
      %v1387 = vadd.f32 %v1385, %v1386
      %v1388 = vrot.slane %v1387, 1
      %v1389 = vadd.f32 %v1387, %v1388
      %v1390 = vsel %vm1382, %v1096, 0.0
      %v1391 = vrot.slane %v1390, 4
      %v1392 = vadd.f32 %v1390, %v1391
      %v1393 = vrot.slane %v1392, 2
      %v1394 = vadd.f32 %v1392, %v1393
      %v1395 = vrot.slane %v1394, 1
      %v1396 = vadd.f32 %v1394, %v1395
      %v1397 = vsel %vm1382, %v1236, 0.0
      %v1398 = vrot.slane %v1397, 4
      %v1399 = vadd.f32 %v1397, %v1398
      %v1400 = vrot.slane %v1399, 2
      %v1401 = vadd.f32 %v1399, %v1400
      %v1402 = vrot.slane %v1401, 1
      %v1403 = vadd.f32 %v1401, %v1402
      %v1404 = vsel %vm1382, %v1238, 0.0
      %v1405 = vrot.slane %v1404, 4
      %v1406 = vadd.f32 %v1404, %v1405
      %v1407 = vrot.slane %v1406, 2
      %v1408 = vadd.f32 %v1406, %v1407
      %v1409 = vrot.slane %v1408, 1
      %v1410 = vadd.f32 %v1408, %v1409
      %v1411 = vsel %vm1382, %v1378, 0.0
      %v1412 = vrot.slane %v1411, 4
      %v1413 = vadd.f32 %v1411, %v1412
      %v1414 = vrot.slane %v1413, 2
      %v1415 = vadd.f32 %v1413, %v1414
      %v1416 = vrot.slane %v1415, 1
      %v1417 = vadd.f32 %v1415, %v1416
      %v1418 = vsel %vm1382, %v1380, 0.0
      %v1419 = vrot.slane %v1418, 4
      %v1420 = vadd.f32 %v1418, %v1419
      %v1421 = vrot.slane %v1420, 2
      %v1422 = vadd.f32 %v1420, %v1421
      %v1423 = vrot.slane %v1422, 1
      %v1424 = vadd.f32 %v1422, %v1423
      %v1425 = vmul.f32 %v1094, %v1094
      %v1426 = vmul.f32 %v1096, %v1096
      %v1427 = vmul.f32 %v1236, %v1236
      %v1428 = vmul.f32 %v1238, %v1238
      %v1429 = vmul.f32 %v1378, %v1378
      %v1430 = vmul.f32 %v1380, %v1380
      %v1431 = vsel %vm1382, %v1425, 0.0
      %v1432 = vrot.slane %v1431, 4
      %v1433 = vadd.f32 %v1431, %v1432
      %v1434 = vrot.slane %v1433, 2
      %v1435 = vadd.f32 %v1433, %v1434
      %v1436 = vrot.slane %v1435, 1
      %v1437 = vadd.f32 %v1435, %v1436
      %v1438 = vsel %vm1382, %v1426, 0.0
      %v1439 = vrot.slane %v1438, 4
      %v1440 = vadd.f32 %v1438, %v1439
      %v1441 = vrot.slane %v1440, 2
      %v1442 = vadd.f32 %v1440, %v1441
      %v1443 = vrot.slane %v1442, 1
      %v1444 = vadd.f32 %v1442, %v1443
      %v1445 = vsel %vm1382, %v1427, 0.0
      %v1446 = vrot.slane %v1445, 4
      %v1447 = vadd.f32 %v1445, %v1446
      %v1448 = vrot.slane %v1447, 2
      %v1449 = vadd.f32 %v1447, %v1448
      %v1450 = vrot.slane %v1449, 1
      %v1451 = vadd.f32 %v1449, %v1450
      %v1452 = vsel %vm1382, %v1428, 0.0
      %v1453 = vrot.slane %v1452, 4
      %v1454 = vadd.f32 %v1452, %v1453
      %v1455 = vrot.slane %v1454, 2
      %v1456 = vadd.f32 %v1454, %v1455
      %v1457 = vrot.slane %v1456, 1
      %v1458 = vadd.f32 %v1456, %v1457
      %v1459 = vsel %vm1382, %v1429, 0.0
      %v1460 = vrot.slane %v1459, 4
      %v1461 = vadd.f32 %v1459, %v1460
      %v1462 = vrot.slane %v1461, 2
      %v1463 = vadd.f32 %v1461, %v1462
      %v1464 = vrot.slane %v1463, 1
      %v1465 = vadd.f32 %v1463, %v1464
      %v1466 = vsel %vm1382, %v1430, 0.0
      %v1467 = vrot.slane %v1466, 4
      %v1468 = vadd.f32 %v1466, %v1467
      %v1469 = vrot.slane %v1468, 2
      %v1470 = vadd.f32 %v1468, %v1469
      %v1471 = vrot.slane %v1470, 1
      %v1472 = vadd.f32 %v1470, %v1471
      %v1473 = vrcp.pop 2.0
      %v1474 = vmul.f32 %v1389, %v1473
      %v1475 = vmul.f32 %v1396, %v1473
      %v1476 = vmul.f32 %v1403, %v1473
      %v1477 = vmul.f32 %v1410, %v1473
      %v1478 = vmul.f32 %v1417, %v1473
      %v1479 = vmul.f32 %v1424, %v1473
      %v1480 = vmul.f32 %v1437, %v1473
      %v1481 = vmul.f32 %v1444, %v1473
      %v1482 = vmul.f32 %v1451, %v1473
      %v1483 = vmul.f32 %v1458, %v1473
      %v1484 = vmul.f32 %v1465, %v1473
      %v1485 = vmul.f32 %v1472, %v1473
      %v1486 = vmul.f32 %v1474, %v1474
      %v1487 = vmul.f32 %v1475, %v1475
      %v1488 = vmul.f32 %v1476, %v1476
      %v1489 = vmul.f32 %v1477, %v1477
      %v1490 = vmul.f32 %v1478, %v1478
      %v1491 = vmul.f32 %v1479, %v1479
      %v1492 = vsub.f32 %v1480, %v1486
      %v1493 = vsub.f32 %v1481, %v1487
      %v1494 = vsub.f32 %v1482, %v1488
      %v1495 = vsub.f32 %v1483, %v1489
      %v1496 = vsub.f32 %v1484, %v1490
      %v1497 = vsub.f32 %v1485, %v1491
      %v1498 = vsub.f32 %v1094, %v1474
      %v1499 = vsub.f32 %v1096, %v1475
      %v1500 = vsub.f32 %v1236, %v1476
      %v1501 = vsub.f32 %v1238, %v1477
      %v1502 = vsub.f32 %v1378, %v1478
      %v1503 = vsub.f32 %v1380, %v1479
      %v1504 = vadd.f32 %v1492, 1e-05
      %v1505 = vadd.f32 %v1493, 1e-05
      %v1506 = vadd.f32 %v1494, 1e-05
      %v1507 = vadd.f32 %v1495, 1e-05
      %v1508 = vadd.f32 %v1496, 1e-05
      %v1509 = vadd.f32 %v1497, 1e-05
      %v1510 = vrsqrt.pop %v1504
      %v1511 = vrsqrt.pop %v1505
      %v1512 = vrsqrt.pop %v1506
      %v1513 = vrsqrt.pop %v1507
      %v1514 = vrsqrt.pop %v1508
      %v1515 = vrsqrt.pop %v1509
      %v1516 = vmul.f32 %v1498, %v1510
      %v1517 = vmul.f32 %v1499, %v1511
      %v1518 = vmul.f32 %v1500, %v1512
      %v1519 = vmul.f32 %v1501, %v1513
      %v1520 = vmul.f32 %v1502, %v1514
      %v1521 = vmul.f32 %v1503, %v1515
      %v1522 = vld [vmem:[#allocation12] sm:$0x3f]
      %v1524 = vlaneseq
      %v1525 = vshrl.u32 %v1524, 7
      %v1526 = vsub.s32 0, %v1525
      %v1527 = vrot.slane %v1522, %v1526
      %v1528 = vlaneseq
      %v1529 = vshrl.u32 %v1528, 7
      %v1530 = vsub.s32 1, %v1529
      %v1531 = vrot.slane %v1522, %v1530
      %v1532 = vlaneseq
      %v1533 = vshrl.u32 %v1532, 7
      %v1534 = vsub.s32 2, %v1533
      %v1535 = vrot.slane %v1522, %v1534
      %v1536 = vlaneseq
      %v1537 = vshrl.u32 %v1536, 7
      %v1538 = vsub.s32 3, %v1537
      %v1539 = vrot.slane %v1522, %v1538
      %v1540 = vlaneseq
      %v1541 = vshrl.u32 %v1540, 7
      %v1542 = vsub.s32 4, %v1541
      %v1543 = vrot.slane %v1522, %v1542
      %v1544 = vlaneseq
      %v1545 = vshrl.u32 %v1544, 7
      %v1546 = vsub.s32 5, %v1545
      %v1547 = vrot.slane %v1522, %v1546
      %v1554 = vmul.f32 %v1516, %v1527
      %v1555 = vmul.f32 %v1517, %v1531
      %v1556 = vmul.f32 %v1518, %v1535
      %v1557 = vmul.f32 %v1519, %v1539
      %v1558 = vmul.f32 %v1520, %v1543
      %v1559 = vmul.f32 %v1521, %v1547
      %v1560 = vld [vmem:[#allocation14] sm:$0x3f]
      %v1562 = vlaneseq
      %v1563 = vshrl.u32 %v1562, 7
      %v1564 = vsub.s32 0, %v1563
      %v1565 = vrot.slane %v1560, %v1564
      %v1566 = vlaneseq
      %v1567 = vshrl.u32 %v1566, 7
      %v1568 = vsub.s32 1, %v1567
      %v1569 = vrot.slane %v1560, %v1568
      %v1570 = vlaneseq
      %v1571 = vshrl.u32 %v1570, 7
      %v1572 = vsub.s32 2, %v1571
      %v1573 = vrot.slane %v1560, %v1572
      %v1574 = vlaneseq
      %v1575 = vshrl.u32 %v1574, 7
      %v1576 = vsub.s32 3, %v1575
      %v1577 = vrot.slane %v1560, %v1576
      %v1578 = vlaneseq
      %v1579 = vshrl.u32 %v1578, 7
      %v1580 = vsub.s32 4, %v1579
      %v1581 = vrot.slane %v1560, %v1580
      %v1582 = vlaneseq
      %v1583 = vshrl.u32 %v1582, 7
      %v1584 = vsub.s32 5, %v1583
      %v1585 = vrot.slane %v1560, %v1584
      %v1592 = vadd.f32 %v1554, %v1565
      %v1593 = vadd.f32 %v1555, %v1569
      %v1594 = vadd.f32 %v1556, %v1573
      %v1595 = vadd.f32 %v1557, %v1577
      %v1596 = vadd.f32 %v1558, %v1581
      %v1597 = vadd.f32 %v1559, %v1585
      %v1598 = vmax.f32 %v1592, 0.0
      %v1599 = vmax.f32 %v1593, 0.0
      %v1600 = vmax.f32 %v1594, 0.0
      %v1601 = vmax.f32 %v1595, 0.0
      %v1602 = vmax.f32 %v1596, 0.0
      %v1603 = vmax.f32 %v1597, 0.0
      %v1604 = vld [vmem:[#allocation15] sm:$0xff]
      %v1605 = vld [vmem:[#allocation15 + $0x8] sm:$0xff]
      %v1606 = vld [vmem:[#allocation15 + $0x10] sm:$0xff]
      %v1607 = vld [vmem:[#allocation15 + $0x18] sm:$0xff]
      %v1608 = vld [vmem:[#allocation15 + $0x20] sm:$0xff]
      %v1609 = vld [vmem:[#allocation15 + $0x28] sm:$0xff]
      %v1610 = vld [vmem:[#allocation15 + $0x30] sm:$0xff]
      %v1611 = vld [vmem:[#allocation15 + $0x38] sm:$0xff]
      %v1612 = vld [vmem:[#allocation15 + $0x40] sm:$0xff]
      %v1613 = vld [vmem:[#allocation15 + $0x48] sm:$0xff]
      %v1614 = vld [vmem:[#allocation15 + $0x50] sm:$0xff]
      %v1615 = vld [vmem:[#allocation15 + $0x58] sm:$0xff]
      %v1616 = vld [vmem:[#allocation15 + $0x60] sm:$0xff]
      %v1617 = vld [vmem:[#allocation15 + $0x68] sm:$0xff]
      %v1618 = vld [vmem:[#allocation15 + $0x70] sm:$0xff]
      %v1619 = vld [vmem:[#allocation15 + $0x78] sm:$0xff]
      %v1620 = vld [vmem:[#allocation15 + $0x80] sm:$0xff]
      %v1621 = vld [vmem:[#allocation15 + $0x88] sm:$0xff]
      %v1622 = vld [vmem:[#allocation15 + $0x90] sm:$0xff]
      %v1623 = vld [vmem:[#allocation15 + $0x98] sm:$0xff]
      %v1624 = vld [vmem:[#allocation15 + $0xa0] sm:$0xff]
      %v1625 = vld [vmem:[#allocation15 + $0xa8] sm:$0xff]
      %v1626 = vld [vmem:[#allocation15 + $0xb0] sm:$0xff]
      %v1627 = vld [vmem:[#allocation15 + $0xb8] sm:$0xff]
      %v1628 = vld [vmem:[#allocation15 + $0xc0] sm:$0xff]
      %v1629 = vld [vmem:[#allocation15 + $0xc8] sm:$0xff]
      %v1630 = vld [vmem:[#allocation15 + $0xd0] sm:$0xff]
      %v1631 = vld [vmem:[#allocation15 + $0xd8] sm:$0xff]
      %v1632 = vld [vmem:[#allocation15 + $0xe0] sm:$0xff]
      %v1633 = vld [vmem:[#allocation15 + $0xe8] sm:$0xff]
      %v1634 = vld [vmem:[#allocation15 + $0xf0] sm:$0xff]
      %v1635 = vld [vmem:[#allocation15 + $0xf8] sm:$0xff]
      %v1636 = vld [vmem:[#allocation15 + $0x100] sm:$0xff]
      %v1637 = vld [vmem:[#allocation15 + $0x108] sm:$0xff]
      %v1638 = vld [vmem:[#allocation15 + $0x110] sm:$0xff]
      %v1639 = vld [vmem:[#allocation15 + $0x118] sm:$0xff]
      %v1640 = vld [vmem:[#allocation15 + $0x120] sm:$0xff]
      %v1641 = vld [vmem:[#allocation15 + $0x128] sm:$0xff]
      %v1642 = vld [vmem:[#allocation15 + $0x130] sm:$0xff]
      %v1643 = vld [vmem:[#allocation15 + $0x138] sm:$0xff]
      %v1644 = vld [vmem:[#allocation15 + $0x140] sm:$0xff]
      %v1645 = vld [vmem:[#allocation15 + $0x148] sm:$0xff]
      %v1646 = vld [vmem:[#allocation15 + $0x150] sm:$0xff]
      %v1647 = vld [vmem:[#allocation15 + $0x158] sm:$0xff]
      %v1648 = vld [vmem:[#allocation15 + $0x160] sm:$0xff]
      %v1649 = vld [vmem:[#allocation15 + $0x168] sm:$0xff]
      %v1650 = vld [vmem:[#allocation15 + $0x170] sm:$0xff]
      %v1651 = vld [vmem:[#allocation15 + $0x178] sm:$0xff]
      %v1652 = vld [vmem:[#allocation15 + $0x180] sm:$0xff]
      %v1653 = vld [vmem:[#allocation15 + $0x188] sm:$0xff]
      %v1654 = vld [vmem:[#allocation15 + $0x190] sm:$0xff]
      %v1655 = vld [vmem:[#allocation15 + $0x198] sm:$0xff]
      %v1656 = vld [vmem:[#allocation15 + $0x1a0] sm:$0xff]
      %v1657 = vld [vmem:[#allocation15 + $0x1a8] sm:$0xff]
      %v1658 = vld [vmem:[#allocation15 + $0x1b0] sm:$0xff]
      %v1659 = vld [vmem:[#allocation15 + $0x1b8] sm:$0xff]
      %v1660 = vld [vmem:[#allocation15 + $0x1c0] sm:$0xff]
      %v1661 = vld [vmem:[#allocation15 + $0x1c8] sm:$0xff]
      %v1662 = vld [vmem:[#allocation15 + $0x1d0] sm:$0xff]
      %v1663 = vld [vmem:[#allocation15 + $0x1d8] sm:$0xff]
      %v1664 = vld [vmem:[#allocation15 + $0x1e0] sm:$0xff]
      %v1665 = vld [vmem:[#allocation15 + $0x1e8] sm:$0xff]
      %v1666 = vld [vmem:[#allocation15 + $0x1f0] sm:$0xff]
      %v1667 = vld [vmem:[#allocation15 + $0x1f8] sm:$0xff]
      %v1668 = vld [vmem:[#allocation15 + $0x200] sm:$0xff]
      %v1669 = vld [vmem:[#allocation15 + $0x208] sm:$0xff]
      %v1670 = vld [vmem:[#allocation15 + $0x210] sm:$0xff]
      %v1671 = vld [vmem:[#allocation15 + $0x218] sm:$0xff]
      %v1672 = vld [vmem:[#allocation15 + $0x220] sm:$0xff]
      %v1673 = vld [vmem:[#allocation15 + $0x228] sm:$0xff]
      %v1674 = vld [vmem:[#allocation15 + $0x230] sm:$0xff]
      %v1675 = vld [vmem:[#allocation15 + $0x238] sm:$0xff]
      %v1676 = vld [vmem:[#allocation15 + $0x240] sm:$0xff]
      %v1677 = vld [vmem:[#allocation15 + $0x248] sm:$0xff]
      %v1678 = vld [vmem:[#allocation15 + $0x250] sm:$0xff]
      %v1679 = vld [vmem:[#allocation15 + $0x258] sm:$0xff]
      %v1680 = vld [vmem:[#allocation15 + $0x260] sm:$0xff]
      %v1681 = vld [vmem:[#allocation15 + $0x268] sm:$0xff]
      %v1682 = vld [vmem:[#allocation15 + $0x270] sm:$0xff]
      %v1683 = vld [vmem:[#allocation15 + $0x278] sm:$0xff]
      %v1684 = vld [vmem:[#allocation15 + $0x280] sm:$0xff]
      %v1685 = vld [vmem:[#allocation15 + $0x288] sm:$0xff]
      %v1686 = vld [vmem:[#allocation15 + $0x290] sm:$0xff]
      %v1687 = vld [vmem:[#allocation15 + $0x298] sm:$0xff]
      %v1688 = vld [vmem:[#allocation15 + $0x2a0] sm:$0xff]
      %v1689 = vld [vmem:[#allocation15 + $0x2a8] sm:$0xff]
      %v1690 = vld [vmem:[#allocation15 + $0x2b0] sm:$0xff]
      %v1691 = vld [vmem:[#allocation15 + $0x2b8] sm:$0xff]
      %v1692 = vld [vmem:[#allocation15 + $0x2c0] sm:$0xff]
      %v1693 = vld [vmem:[#allocation15 + $0x2c8] sm:$0xff]
      %v1694 = vld [vmem:[#allocation15 + $0x2d0] sm:$0xff]
      %v1695 = vld [vmem:[#allocation15 + $0x2d8] sm:$0xff]
      %v1696 = vld [vmem:[#allocation15 + $0x2e0] sm:$0xff]
      %v1697 = vld [vmem:[#allocation15 + $0x2e8] sm:$0xff]
      %v1698 = vld [vmem:[#allocation15 + $0x2f0] sm:$0xff]
      %v1699 = vld [vmem:[#allocation15 + $0x2f8] sm:$0xff]
      %v1700 = vld [vmem:[#allocation17] sm:$0x1]
      %v1702 = vlaneseq
      %v1703 = vshrl.u32 %v1702, 7
      %v1704 = vsub.s32 0, %v1703
      %v1705 = vrot.slane %v1700, %v1704
      %1707 = vmatprep.subr.mxu0 0.0
      %1708 = vmatpush1.msra.mxu0 %v1604
      %1709 = vmatprep.subr.mxu0 0.0
      %1710 = vmatpush1.msra.mxu0 %v1605
      %1711 = vmatprep.subr.mxu0 0.0
      %1712 = vmatpush1.msra.mxu0 %v1606
      %1713 = vmatprep.subr.mxu0 0.0
      %1714 = vmatpush1.msra.mxu0 %v1607
      %1715 = vmatprep.subr.mxu0 0.0
      %1716 = vmatpush1.msra.mxu0 %v1608
      %1717 = vmatprep.subr.mxu0 0.0
      %1718 = vmatpush1.msra.mxu0 %v1609
      %1719 = vmatprep.subr.mxu0 0.0
      %1720 = vmatpush1.msra.mxu0 %v1610
      %1721 = vmatprep.subr.mxu0 0.0
      %1722 = vmatpush1.msra.mxu0 %v1611
      %1723 = vmatprep.subr.mxu0 0.0
      %1724 = vmatpush1.msra.mxu0 %v1612
      %1725 = vmatprep.subr.mxu0 0.0
      %1726 = vmatpush1.msra.mxu0 %v1613
      %1727 = vmatprep.subr.mxu0 0.0
      %1728 = vmatpush1.msra.mxu0 %v1614
      %1729 = vmatprep.subr.mxu0 0.0
      %1730 = vmatpush1.msra.mxu0 %v1615
      %1731 = vmatprep.subr.mxu0 0.0
      %1732 = vmatpush1.msra.mxu0 %v1616
      %1733 = vmatprep.subr.mxu0 0.0
      %1734 = vmatpush1.msra.mxu0 %v1617
      %1735 = vmatprep.subr.mxu0 0.0
      %1736 = vmatpush1.msra.mxu0 %v1618
      %1737 = vmatprep.subr.mxu0 0.0
      %1738 = vmatpush1.msra.mxu0 %v1619
      %1739 = vmatprep.subr.mxu0 0.0
      %1740 = vmatpush1.msra.mxu0 %v1620
      %1741 = vmatprep.subr.mxu0 0.0
      %1742 = vmatpush1.msra.mxu0 %v1621
      %1743 = vmatprep.subr.mxu0 0.0
      %1744 = vmatpush1.msra.mxu0 %v1622
      %1745 = vmatprep.subr.mxu0 0.0
      %1746 = vmatpush1.msra.mxu0 %v1623
      %1747 = vmatprep.subr.mxu0 0.0
      %1748 = vmatpush1.msra.mxu0 %v1624
      %1749 = vmatprep.subr.mxu0 0.0
      %1750 = vmatpush1.msra.mxu0 %v1625
      %1751 = vmatprep.subr.mxu0 0.0
      %1752 = vmatpush1.msra.mxu0 %v1626
      %1753 = vmatprep.subr.mxu0 0.0
      %1754 = vmatpush1.msra.mxu0 %v1627
      %1755 = vmatprep.subr.mxu0 0.0
      %1756 = vmatpush1.msra.mxu0 %v1628
      %1757 = vmatprep.subr.mxu0 0.0
      %1758 = vmatpush1.msra.mxu0 %v1629
      %1759 = vmatprep.subr.mxu0 0.0
      %1760 = vmatpush1.msra.mxu0 %v1630
      %1761 = vmatprep.subr.mxu0 0.0
      %1762 = vmatpush1.msra.mxu0 %v1631
      %1763 = vmatprep.subr.mxu0 0.0
      %1764 = vmatpush1.msra.mxu0 %v1632
      %1765 = vmatprep.subr.mxu0 0.0
      %1766 = vmatpush1.msra.mxu0 %v1633
      %1767 = vmatprep.subr.mxu0 0.0
      %1768 = vmatpush1.msra.mxu0 %v1634
      %1769 = vmatprep.subr.mxu0 0.0
      %1770 = vmatpush1.msra.mxu0 %v1635
      %1771 = vmatprep.mubr.f32.mxu0 %v1599
      %1772 = vmatmul.mubr.f32.gmra.mrb[0].mxu0 %v1598
      %v1773 = vpop.f32.mrb[0].mxu0
      %v1774 = vadd.f32 %v1705, %v1773
      %v1775 = vpop.f32.mrb[0].mxu0
      %1776 = vdwg.mxu0
      %1777 = vmatprep.subr.mxu0 0.0
      %1778 = vmatpush1.msra.mxu0 %v1636
      %1779 = vmatprep.subr.mxu0 0.0
      %1780 = vmatpush1.msra.mxu0 %v1637
      %1781 = vmatprep.subr.mxu0 0.0
      %1782 = vmatpush1.msra.mxu0 %v1638
      %1783 = vmatprep.subr.mxu0 0.0
      %1784 = vmatpush1.msra.mxu0 %v1639
      %1785 = vmatprep.subr.mxu0 0.0
      %1786 = vmatpush1.msra.mxu0 %v1640
      %1787 = vmatprep.subr.mxu0 0.0
      %1788 = vmatpush1.msra.mxu0 %v1641
      %1789 = vmatprep.subr.mxu0 0.0
      %1790 = vmatpush1.msra.mxu0 %v1642
      %1791 = vmatprep.subr.mxu0 0.0
      %1792 = vmatpush1.msra.mxu0 %v1643
      %1793 = vmatprep.subr.mxu0 0.0
      %1794 = vmatpush1.msra.mxu0 %v1644
      %1795 = vmatprep.subr.mxu0 0.0
      %1796 = vmatpush1.msra.mxu0 %v1645
      %1797 = vmatprep.subr.mxu0 0.0
      %1798 = vmatpush1.msra.mxu0 %v1646
      %1799 = vmatprep.subr.mxu0 0.0
      %1800 = vmatpush1.msra.mxu0 %v1647
      %1801 = vmatprep.subr.mxu0 0.0
      %1802 = vmatpush1.msra.mxu0 %v1648
      %1803 = vmatprep.subr.mxu0 0.0
      %1804 = vmatpush1.msra.mxu0 %v1649
      %1805 = vmatprep.subr.mxu0 0.0
      %1806 = vmatpush1.msra.mxu0 %v1650
      %1807 = vmatprep.subr.mxu0 0.0
      %1808 = vmatpush1.msra.mxu0 %v1651
      %1809 = vmatprep.subr.mxu0 0.0
      %1810 = vmatpush1.msra.mxu0 %v1652
      %1811 = vmatprep.subr.mxu0 0.0
      %1812 = vmatpush1.msra.mxu0 %v1653
      %1813 = vmatprep.subr.mxu0 0.0
      %1814 = vmatpush1.msra.mxu0 %v1654
      %1815 = vmatprep.subr.mxu0 0.0
      %1816 = vmatpush1.msra.mxu0 %v1655
      %1817 = vmatprep.subr.mxu0 0.0
      %1818 = vmatpush1.msra.mxu0 %v1656
      %1819 = vmatprep.subr.mxu0 0.0
      %1820 = vmatpush1.msra.mxu0 %v1657
      %1821 = vmatprep.subr.mxu0 0.0
      %1822 = vmatpush1.msra.mxu0 %v1658
      %1823 = vmatprep.subr.mxu0 0.0
      %1824 = vmatpush1.msra.mxu0 %v1659
      %1825 = vmatprep.subr.mxu0 0.0
      %1826 = vmatpush1.msra.mxu0 %v1660
      %1827 = vmatprep.subr.mxu0 0.0
      %1828 = vmatpush1.msra.mxu0 %v1661
      %1829 = vmatprep.subr.mxu0 0.0
      %1830 = vmatpush1.msra.mxu0 %v1662
      %1831 = vmatprep.subr.mxu0 0.0
      %1832 = vmatpush1.msra.mxu0 %v1663
      %1833 = vmatprep.subr.mxu0 0.0
      %1834 = vmatpush1.msra.mxu0 %v1664
      %1835 = vmatprep.subr.mxu0 0.0
      %1836 = vmatpush1.msra.mxu0 %v1665
      %1837 = vmatprep.subr.mxu0 0.0
      %1838 = vmatpush1.msra.mxu0 %v1666
      %1839 = vmatprep.subr.mxu0 0.0
      %1840 = vmatpush1.msra.mxu0 %v1667
      %1841 = vmatprep.mubr.f32.mxu0 %v1601
      %1842 = vmatmul.mubr.f32.gmra.mrb[0].mxu0 %v1600
      %v1843 = vpop.f32.mrb[0].mxu0
      %v1844 = vadd.f32 %v1774, %v1843
      %v1845 = vpop.f32.mrb[0].mxu0
      %1846 = vdwg.mxu0
      %1847 = vmatprep.subr.mxu0 0.0
      %1848 = vmatpush1.msra.mxu0 %v1668
      %1849 = vmatprep.subr.mxu0 0.0
      %1850 = vmatpush1.msra.mxu0 %v1669
      %1851 = vmatprep.subr.mxu0 0.0
      %1852 = vmatpush1.msra.mxu0 %v1670
      %1853 = vmatprep.subr.mxu0 0.0
      %1854 = vmatpush1.msra.mxu0 %v1671
      %1855 = vmatprep.subr.mxu0 0.0
      %1856 = vmatpush1.msra.mxu0 %v1672
      %1857 = vmatprep.subr.mxu0 0.0
      %1858 = vmatpush1.msra.mxu0 %v1673
      %1859 = vmatprep.subr.mxu0 0.0
      %1860 = vmatpush1.msra.mxu0 %v1674
      %1861 = vmatprep.subr.mxu0 0.0
      %1862 = vmatpush1.msra.mxu0 %v1675
      %1863 = vmatprep.subr.mxu0 0.0
      %1864 = vmatpush1.msra.mxu0 %v1676
      %1865 = vmatprep.subr.mxu0 0.0
      %1866 = vmatpush1.msra.mxu0 %v1677
      %1867 = vmatprep.subr.mxu0 0.0
      %1868 = vmatpush1.msra.mxu0 %v1678
      %1869 = vmatprep.subr.mxu0 0.0
      %1870 = vmatpush1.msra.mxu0 %v1679
      %1871 = vmatprep.subr.mxu0 0.0
      %1872 = vmatpush1.msra.mxu0 %v1680
      %1873 = vmatprep.subr.mxu0 0.0
      %1874 = vmatpush1.msra.mxu0 %v1681
      %1875 = vmatprep.subr.mxu0 0.0
      %1876 = vmatpush1.msra.mxu0 %v1682
      %1877 = vmatprep.subr.mxu0 0.0
      %1878 = vmatpush1.msra.mxu0 %v1683
      %1879 = vmatprep.subr.mxu0 0.0
      %1880 = vmatpush1.msra.mxu0 %v1684
      %1881 = vmatprep.subr.mxu0 0.0
      %1882 = vmatpush1.msra.mxu0 %v1685
      %1883 = vmatprep.subr.mxu0 0.0
      %1884 = vmatpush1.msra.mxu0 %v1686
      %1885 = vmatprep.subr.mxu0 0.0
      %1886 = vmatpush1.msra.mxu0 %v1687
      %1887 = vmatprep.subr.mxu0 0.0
      %1888 = vmatpush1.msra.mxu0 %v1688
      %1889 = vmatprep.subr.mxu0 0.0
      %1890 = vmatpush1.msra.mxu0 %v1689
      %1891 = vmatprep.subr.mxu0 0.0
      %1892 = vmatpush1.msra.mxu0 %v1690
      %1893 = vmatprep.subr.mxu0 0.0
      %1894 = vmatpush1.msra.mxu0 %v1691
      %1895 = vmatprep.subr.mxu0 0.0
      %1896 = vmatpush1.msra.mxu0 %v1692
      %1897 = vmatprep.subr.mxu0 0.0
      %1898 = vmatpush1.msra.mxu0 %v1693
      %1899 = vmatprep.subr.mxu0 0.0
      %1900 = vmatpush1.msra.mxu0 %v1694
      %1901 = vmatprep.subr.mxu0 0.0
      %1902 = vmatpush1.msra.mxu0 %v1695
      %1903 = vmatprep.subr.mxu0 0.0
      %1904 = vmatpush1.msra.mxu0 %v1696
      %1905 = vmatprep.subr.mxu0 0.0
      %1906 = vmatpush1.msra.mxu0 %v1697
      %1907 = vmatprep.subr.mxu0 0.0
      %1908 = vmatpush1.msra.mxu0 %v1698
      %1909 = vmatprep.subr.mxu0 0.0
      %1910 = vmatpush1.msra.mxu0 %v1699
      %1911 = vmatprep.mubr.f32.mxu0 %v1603
      %1912 = vmatmul.mubr.f32.gmra.mrb[0].mxu0 %v1602
      %v1913 = vpop.f32.mrb[0].mxu0
      %v1914 = vadd.f32 %v1844, %v1913
      %v1915 = vpop.f32.mrb[0].mxu0
      %1916 = vdwg.mxu0
      %1917 = vst [vmem:[#allocation18] sm:$0xff] %v1914
    $region77: #{tpu_custom_call.1} parent=1 // pred_fallthru
      _
    // Predicated region
    $region78: #{tpu_custom_call.1} parent=1 // pred_check
      _
    $region79: #{tpu_custom_call.1} parent=1 // pred_check_branch
      %1919 = sbr.rel (0) target = $region81
    $region80: #{tpu_custom_call.1} parent=1 // pred_region
      %s1921 = ssub.s32 128, 128
      %1922 = vsyncadd [#allocation5], %s1921
      %s1924 = sshll.u32 [#allocation18], 4
      %s1925 = int_to_ptr.vmem [resolvable:$true] %s1924
      %1927 = dma.vmem_to_hbm [thread:$0]  %s1925, 128, %s9, [#allocation5]
    $region81: #{tpu_custom_call.1} parent=1 // pred_fallthru
      _
    // Predicated region
    $region82: #{tpu_custom_call.1} parent=1 // pred_check
      _
    $region83: #{tpu_custom_call.1} parent=1 // pred_check_branch
      %1929 = sbr.rel (0) target = $region85
    $region84: #{tpu_custom_call.1} parent=1 // pred_region
      %1930 = dma.done [#allocation5], 128
    $region85: #{tpu_custom_call.1} parent=1 // pred_fallthru
      _
    %1931 = vsyncpa [#allocation4], 1
    %1932 = vsyncpa [#allocation7], 1
    %1933 = vsyncpa [#allocation10], 1
    %1934 = vsyncpa [#allocation13], 1
    %1935 = vsyncpa [#allocation16], 1
    %1936 = vsyncpa [#allocation5], 1

</llo_original>
